<compile_context>
chip_gen: v6e
topology: v6e:2x2x1
jax: 0.10.0
libtpu: 0.0.40
codegen_flags: <defaults>
</compile_context>

<pallas_src>
import functools

import jax
import jax.numpy as jnp
from jax.experimental import pallas as pl
from jax.experimental.pallas import tpu as pltpu

GATE_PAD = 128  # each gate occupies its own 128-lane block in the fused layout


def _round_up(x, m):
    return (x + m - 1) // m * m


def _lstm_kernel(x_ref, w_ref, s_ref, out_ref, *, seq_len, in_rows, hid_rows):
    """One sequence: full LSTM recurrence + final linear layer.

    x_ref  : (1, T, Ip)          input sequence (lane-padded to Ip)
    w_ref  : (Ip + 2*Hp, 512)    bf16 weight slab, rows:
                                   [0, Ip)        W_ih  (gate blocks [i|f|o|g])
                                   [Ip, Ip+Hp)    W_hh  (same layout)
                                   [Ip+Hp, end)   W_lin (real cols in lanes 0..O)
    s_ref  : (4, 512)            f32 state slab, rows:
                                   0: fused bias (b_ih + b_hh), gate blocks
                                   1: h0 (lanes 0..H), 2: c0, 3: b_lin (lanes 0..O)
    out_ref: (1, 1, 128)         lane-dense padded prediction[-1]
    """
    G = GATE_PAD
    Ip, Hp = in_rows, hid_rows

    x = x_ref[0].astype(jnp.bfloat16)                         # (T, Ip)
    b = s_ref[0:1, :]                                         # (1, 4G) f32

    # Hoisted input projection: one (T, Ip) @ (Ip, 512) matmul covers every
    # timestep's x_t . W_ih; the fused bias is folded in here.
    xproj = jnp.dot(x, w_ref[0:Ip, :],
                    preferred_element_type=jnp.float32) + b   # (T, 4G) f32

    # h/c carried at padded width Hp; pad lanes start at 0 and stay exactly 0
    # (i=f=o=0.5, g=0 on pad lanes -> c_pad = 0.5*0 + 0.5*0 = 0, h_pad = 0).
    h = s_ref[1:2, 0:Hp]                                      # (1, Hp) f32
    c = s_ref[2:3, 0:Hp]                                      # (1, Hp) f32

    # Static trip count -> fully unrolled recurrence. W_hh is re-read from
    # VMEM each step (vld slots idle) instead of being pinned in vregs.
    # TODO(synk): on v7x the h @ W_hh could use pltpu.matmul_push_rhs /
    # matmul_acc_lhs to hold W_hh in MXU weight registers and accumulate
    # xproj[t] in the MRB; jnp.dot is kept for portable lowering on v5e/v6e.
    for t in range(seq_len):
        pre = xproj[t:t + 1, :] + jnp.dot(
            h.astype(jnp.bfloat16), w_ref[Ip:Ip + Hp, :],
            preferred_element_type=jnp.float32)               # (1, 4G) f32
        # Gate blocks [i | f | o | g]: one sigmoid over the contiguous i/f/o
        # slab, one tanh for g (2 EUP pushes per step).
        sio = jax.nn.sigmoid(pre[:, :3 * G])                  # (1, 384)
        i_g = sio[:, 0:Hp]
        f_g = sio[:, G:G + Hp]
        o_g = sio[:, 2 * G:2 * G + Hp]
        g_g = jnp.tanh(pre[:, 3 * G:3 * G + Hp])

        c = f_g * c + i_g * g_g
        h = o_g * jnp.tanh(c)

    # prediction[-1] = linear(h_T); lane-dense 128-wide padded output.
    out = jnp.dot(h.astype(jnp.bfloat16), w_ref[Ip + Hp:Ip + 2 * Hp, 0:G],
                  preferred_element_type=jnp.float32) + s_ref[3:4, 0:G]
    out_ref[0] = out


def vanilla_lstm_forward_batched(sequences, w_slab, s_slab, output_size):
    """sequences: (B, T, input_size) f32 -> (B, output_size) f32.

    Each batch element is an independent sequence sharing the module's
    (h0, c0); a "parallel" grid axis over B amortizes launch overhead and
    uses both TensorCores on v7x.
    """
    B, T, I = sequences.shape
    G = GATE_PAD
    Ip = _round_up(I, 8)
    Hp = (w_slab.shape[0] - Ip) // 2
    rows = w_slab.shape[0]

    # Lane-pad the sequence to the 8-row-aligned W_ih region width.
    x = jnp.zeros((B, T, Ip), sequences.dtype).at[:, :, :I].set(sequences)

    kernel = functools.partial(_lstm_kernel, seq_len=T, in_rows=Ip,
                               hid_rows=Hp)
    out = pl.pallas_call(
        kernel,
        out_shape=jax.ShapeDtypeStruct((B, 1, G), jnp.float32),
        grid=(B,),
        in_specs=[
            pl.BlockSpec((1, T, Ip), lambda b: (b, 0, 0)),      # per-sequence
            pl.BlockSpec((rows, 4 * G), lambda b: (0, 0)),       # resident
            pl.BlockSpec((4, 4 * G), lambda b: (0, 0)),          # resident
        ],
        out_specs=pl.BlockSpec((1, 1, G), lambda b: (b, 0, 0)),
        compiler_params=pltpu.CompilerParams(
            dimension_semantics=("parallel",)),
    )(x, w_slab, s_slab)
    return out[:, 0, :output_size]                              # (B, O)


def vanilla_lstm_forward(sequence, w_slab, s_slab, output_size):
    """Single-sequence forward: (T, input_size) -> (1, output_size)."""
    return vanilla_lstm_forward_batched(sequence[None], w_slab, s_slab,
                                        output_size)


def pack_params(params):
    """Repack natural per-gate params into two lane-dense kernel slabs.

    Gate order (i, f, g, o) is reordered into lane blocks [i | f | o | g] so
    the three sigmoid gates form one contiguous 384-lane slab; each gate's H
    columns sit at the start of its own 128-lane block (rest zero).  Weight
    rows are grouped into 8-row-aligned regions; the weight slab is bf16
    (MXU-native), the small state slab stays f32.
    """
    wih, whh, bias, h0, c0, wlin, blin = params
    I = wih.shape[1]
    H = wih.shape[2]
    O = wlin.shape[1]
    G = GATE_PAD
    Ip = _round_up(I, 8)
    Hp = _round_up(H, 8)

    block_order = (0, 1, 3, 2)  # i, f, o, g
    w_slab = jnp.zeros((Ip + 2 * Hp, 4 * G), jnp.float32)
    s_slab = jnp.zeros((4, 4 * G), jnp.float32)
    for blk, g in enumerate(block_order):
        lo = blk * G
        w_slab = w_slab.at[0:I, lo:lo + H].set(wih[g])
        w_slab = w_slab.at[Ip:Ip + H, lo:lo + H].set(whh[g])
        s_slab = s_slab.at[0, lo:lo + H].set(bias[g][0])
    w_slab = w_slab.at[Ip + Hp:Ip + Hp + H, 0:O].set(wlin)
    s_slab = s_slab.at[1, 0:H].set(h0[0])
    s_slab = s_slab.at[2, 0:H].set(c0[0])
    s_slab = s_slab.at[3, 0:O].set(blin[0])

    return w_slab.astype(jnp.bfloat16), s_slab


def reference_forward(sequence, params):
    """Pure-JAX f32 reference mirroring torch.nn.LSTM + nn.Linear."""
    wih, whh, bias, h0, c0, wlin, blin = params
    h, c = h0, c0
    for t in range(sequence.shape[0]):
        x_t = sequence[t:t + 1, :]
        i = jax.nn.sigmoid(x_t @ wih[0] + h @ whh[0] + bias[0])
        f = jax.nn.sigmoid(x_t @ wih[1] + h @ whh[1] + bias[1])
        g = jnp.tanh(x_t @ wih[2] + h @ whh[2] + bias[2])
        o = jax.nn.sigmoid(x_t @ wih[3] + h @ whh[3] + bias[3])
        c = f * c + i * g
        h = o * jnp.tanh(c)
    return h @ wlin + blin


def make_params(key, input_size, hidden_size, output_size):
    """Deterministic parameter init (PyTorch-style uniform(-1/sqrt(H), 1/sqrt(H)))."""
    ks = jax.random.split(key, 8)
    bound = 1.0 / jnp.sqrt(hidden_size)

    # nn.LSTM stores weight_ih_l0 (4H, I); kept per-gate transposed (4, I, H),
    # gate order (i, f, g, o).
    wih = jax.random.uniform(ks[0], (4, input_size, hidden_size),
                             jnp.float32, -bound, bound)
    whh = jax.random.uniform(ks[1], (4, hidden_size, hidden_size),
                             jnp.float32, -bound, bound)
    b_ih = jax.random.uniform(ks[2], (4, 1, hidden_size), jnp.float32, -bound, bound)
    b_hh = jax.random.uniform(ks[3], (4, 1, hidden_size), jnp.float32, -bound, bound)
    bias = b_ih + b_hh

    # self.hidden_output = (randn(1,1,H), randn(1,1,H)) -> squeeze layer axis
    h0 = jax.random.normal(ks[4], (1, hidden_size), jnp.float32)
    c0 = jax.random.normal(ks[5], (1, hidden_size), jnp.float32)

    # nn.Linear(hidden_size, output_size): weight (O, H) -> transposed (H, O)
    wlin = jax.random.uniform(ks[6], (hidden_size, output_size),
                              jnp.float32, -bound, bound)
    blin = jax.random.uniform(ks[7], (1, output_size),
                              jnp.float32, -bound, bound)

    return (wih, whh, bias, h0, c0, wlin, blin)


if __name__ == "__main__":
    input_size = 3
    hidden_size = 36
    output_size = 3
    seq_len = 8
    batch = 4  # independent sequences on the parallel grid axis

    key = jax.random.PRNGKey(0)
    k_params, k_seq = jax.random.split(key)

    params = make_params(k_params, input_size, hidden_size, output_size)
    w_slab, s_slab = pack_params(params)
    sequences = jax.random.normal(k_seq, (batch, seq_len, input_size),
                                  jnp.float32)

    # Batched forward (grid over sequences).
    out_b = vanilla_lstm_forward_batched(sequences, w_slab, s_slab, output_size)
    out_b = jax.block_until_ready(out_b)
    assert out_b.shape == (batch, output_size)

    # Single-sequence forward (module semantics: prediction[-1] -> (1, O)).
    out_1 = vanilla_lstm_forward(sequences[0], w_slab, s_slab, output_size)
    out_1 = jax.block_until_ready(out_1)
    assert out_1.shape == (1, output_size)

    # Verify against the pure-f32 reference (bf16 MXU operands -> loose tol).
    for bidx in range(batch):
        ref = reference_forward(sequences[bidx], params)
        assert jnp.allclose(out_b[bidx:bidx + 1], ref, atol=3e-2, rtol=3e-2), (
            bidx, out_b[bidx], ref)
    ref0 = reference_forward(sequences[0], params)
    assert jnp.allclose(out_1, ref0, atol=3e-2, rtol=3e-2), (out_1, ref0)

    # TODO(synk): train()/predict()/reset_hidden_state() loops and dropout
    # (inactive for num_layers=1, dropout=0) are host-side training utilities,
    # not part of the forward kernel.
    print("KERNEL_OK")
</pallas_src>

<mosaic_0001>
module attributes {stable_mosaic.version = 11 : i64} {
  func.func @_lstm_kernel(%arg0: i32, %arg1: memref<1x8x8xf32, #tpu.memory_space<vmem>>, %arg2: memref<88x512xbf16, #tpu.memory_space<vmem>>, %arg3: memref<4x512xf32, #tpu.memory_space<vmem>>, %arg4: memref<1x1x128xf32, #tpu.memory_space<vmem>>) attributes {dimension_semantics = [#tpu.dimension_semantics<parallel>], iteration_bounds = array<i64: 4>, scalar_prefetch = 0 : i64, scratch_operands = 0 : i64, tpu.core_type = #tpu.core_type<tc>, window_params = [{transform_indices = @transform_0, window_bounds = array<i64: 1, 8, 8>}, {pipeline_mode = #tpu.pipeline_mode<synchronous>, transform_indices = @transform_1, window_bounds = array<i64: 88, 512>}, {pipeline_mode = #tpu.pipeline_mode<synchronous>, transform_indices = @transform_2, window_bounds = array<i64: 4, 512>}, {transform_indices = @transform_3, window_bounds = array<i64: 1, 1, 128>}]} {
    %c0 = arith.constant 0 : index
    %c0_0 = arith.constant 0 : index
    %c0_1 = arith.constant 0 : index
    %0 = vector.load %arg1[%c0, %c0_0, %c0_1] : memref<1x8x8xf32, #tpu.memory_space<vmem>>, vector<1x8x8xf32>
    %1 = vector.shape_cast %0 : vector<1x8x8xf32> to vector<8x8xf32>
    %2 = arith.truncf %1 : vector<8x8xf32> to vector<8x8xbf16>
    %c0_2 = arith.constant 0 : index
    %c0_3 = arith.constant 0 : index
    %3 = vector.load %arg3[%c0_2, %c0_3] : memref<4x512xf32, #tpu.memory_space<vmem>>, vector<1x512xf32>
    %c0_4 = arith.constant 0 : index
    %c0_5 = arith.constant 0 : index
    %4 = vector.load %arg2[%c0_4, %c0_5] : memref<88x512xbf16, #tpu.memory_space<vmem>>, vector<8x512xbf16>
    %cst = arith.constant dense<0.000000e+00> : vector<8x512xf32>
    %5 = tpu.matmul %2, %4, %cst {dimension_numbers = #tpu.dot_dimension_numbers<[1], [0], [0], [1], [0, 0, 1, 1], [], []>} : vector<8x8xbf16>, vector<8x512xbf16>, vector<8x512xf32> -> vector<8x512xf32>
    %6 = vector.broadcast %3 : vector<1x512xf32> to vector<8x512xf32>
    %7 = arith.addf %5, %6 : vector<8x512xf32>
    %c1 = arith.constant 1 : index
    %c0_6 = arith.constant 0 : index
    %8 = vector.load %arg3[%c1, %c0_6] : memref<4x512xf32, #tpu.memory_space<vmem>>, vector<1x40xf32>
    %c2 = arith.constant 2 : index
    %c0_7 = arith.constant 0 : index
    %9 = vector.load %arg3[%c2, %c0_7] : memref<4x512xf32, #tpu.memory_space<vmem>>, vector<1x40xf32>
    %10 = vector.extract_strided_slice %7 {offsets = [0, 0], sizes = [1, 512], strides = [1, 1]} : vector<8x512xf32> to vector<1x512xf32>
    %11 = arith.truncf %8 : vector<1x40xf32> to vector<1x40xbf16>
    %c8 = arith.constant 8 : index
    %c0_8 = arith.constant 0 : index
    %12 = vector.load %arg2[%c8, %c0_8] : memref<88x512xbf16, #tpu.memory_space<vmem>>, vector<40x512xbf16>
    %cst_9 = arith.constant dense<0.000000e+00> : vector<1x512xf32>
    %13 = tpu.matmul %11, %12, %cst_9 {dimension_numbers = #tpu.dot_dimension_numbers<[1], [0], [0], [1], [0, 0, 1, 1], [], []>} : vector<1x40xbf16>, vector<40x512xbf16>, vector<1x512xf32> -> vector<1x512xf32>
    %14 = arith.addf %10, %13 : vector<1x512xf32>
    %15 = vector.extract_strided_slice %14 {offsets = [0, 0], sizes = [1, 384], strides = [1, 1]} : vector<1x512xf32> to vector<1x384xf32>
    %16 = arith.negf %15 : vector<1x384xf32>
    %17 = math.exp %16 : vector<1x384xf32>
    %cst_10 = arith.constant 1.000000e+00 : f32
    %18 = vector.broadcast %cst_10 : f32 to vector<1x384xf32>
    %19 = arith.addf %18, %17 : vector<1x384xf32>
    %20 = arith.divf %18, %19 : vector<1x384xf32>
    %21 = vector.extract_strided_slice %20 {offsets = [0, 0], sizes = [1, 40], strides = [1, 1]} : vector<1x384xf32> to vector<1x40xf32>
    %22 = vector.extract_strided_slice %20 {offsets = [0, 128], sizes = [1, 40], strides = [1, 1]} : vector<1x384xf32> to vector<1x40xf32>
    %23 = vector.extract_strided_slice %20 {offsets = [0, 256], sizes = [1, 40], strides = [1, 1]} : vector<1x384xf32> to vector<1x40xf32>
    %24 = vector.extract_strided_slice %14 {offsets = [0, 384], sizes = [1, 40], strides = [1, 1]} : vector<1x512xf32> to vector<1x40xf32>
    %25 = math.tanh %24 : vector<1x40xf32>
    %26 = arith.mulf %22, %9 : vector<1x40xf32>
    %27 = arith.mulf %21, %25 : vector<1x40xf32>
    %28 = arith.addf %26, %27 : vector<1x40xf32>
    %29 = math.tanh %28 : vector<1x40xf32>
    %30 = arith.mulf %23, %29 : vector<1x40xf32>
    %31 = vector.extract_strided_slice %7 {offsets = [1, 0], sizes = [1, 512], strides = [1, 1]} : vector<8x512xf32> to vector<1x512xf32>
    %32 = arith.truncf %30 : vector<1x40xf32> to vector<1x40xbf16>
    %c8_11 = arith.constant 8 : index
    %c0_12 = arith.constant 0 : index
    %33 = vector.load %arg2[%c8_11, %c0_12] : memref<88x512xbf16, #tpu.memory_space<vmem>>, vector<40x512xbf16>
    %cst_13 = arith.constant dense<0.000000e+00> : vector<1x512xf32>
    %34 = tpu.matmul %32, %33, %cst_13 {dimension_numbers = #tpu.dot_dimension_numbers<[1], [0], [0], [1], [0, 0, 1, 1], [], []>} : vector<1x40xbf16>, vector<40x512xbf16>, vector<1x512xf32> -> vector<1x512xf32>
    %35 = arith.addf %31, %34 : vector<1x512xf32>
    %36 = vector.extract_strided_slice %35 {offsets = [0, 0], sizes = [1, 384], strides = [1, 1]} : vector<1x512xf32> to vector<1x384xf32>
    %37 = arith.negf %36 : vector<1x384xf32>
    %38 = math.exp %37 : vector<1x384xf32>
    %cst_14 = arith.constant 1.000000e+00 : f32
    %39 = vector.broadcast %cst_14 : f32 to vector<1x384xf32>
    %40 = arith.addf %39, %38 : vector<1x384xf32>
    %41 = arith.divf %39, %40 : vector<1x384xf32>
    %42 = vector.extract_strided_slice %41 {offsets = [0, 0], sizes = [1, 40], strides = [1, 1]} : vector<1x384xf32> to vector<1x40xf32>
    %43 = vector.extract_strided_slice %41 {offsets = [0, 128], sizes = [1, 40], strides = [1, 1]} : vector<1x384xf32> to vector<1x40xf32>
    %44 = vector.extract_strided_slice %41 {offsets = [0, 256], sizes = [1, 40], strides = [1, 1]} : vector<1x384xf32> to vector<1x40xf32>
    %45 = vector.extract_strided_slice %35 {offsets = [0, 384], sizes = [1, 40], strides = [1, 1]} : vector<1x512xf32> to vector<1x40xf32>
    %46 = math.tanh %45 : vector<1x40xf32>
    %47 = arith.mulf %43, %28 : vector<1x40xf32>
    %48 = arith.mulf %42, %46 : vector<1x40xf32>
    %49 = arith.addf %47, %48 : vector<1x40xf32>
    %50 = math.tanh %49 : vector<1x40xf32>
    %51 = arith.mulf %44, %50 : vector<1x40xf32>
    %52 = vector.extract_strided_slice %7 {offsets = [2, 0], sizes = [1, 512], strides = [1, 1]} : vector<8x512xf32> to vector<1x512xf32>
    %53 = arith.truncf %51 : vector<1x40xf32> to vector<1x40xbf16>
    %c8_15 = arith.constant 8 : index
    %c0_16 = arith.constant 0 : index
    %54 = vector.load %arg2[%c8_15, %c0_16] : memref<88x512xbf16, #tpu.memory_space<vmem>>, vector<40x512xbf16>
    %cst_17 = arith.constant dense<0.000000e+00> : vector<1x512xf32>
    %55 = tpu.matmul %53, %54, %cst_17 {dimension_numbers = #tpu.dot_dimension_numbers<[1], [0], [0], [1], [0, 0, 1, 1], [], []>} : vector<1x40xbf16>, vector<40x512xbf16>, vector<1x512xf32> -> vector<1x512xf32>
    %56 = arith.addf %52, %55 : vector<1x512xf32>
    %57 = vector.extract_strided_slice %56 {offsets = [0, 0], sizes = [1, 384], strides = [1, 1]} : vector<1x512xf32> to vector<1x384xf32>
    %58 = arith.negf %57 : vector<1x384xf32>
    %59 = math.exp %58 : vector<1x384xf32>
    %cst_18 = arith.constant 1.000000e+00 : f32
    %60 = vector.broadcast %cst_18 : f32 to vector<1x384xf32>
    %61 = arith.addf %60, %59 : vector<1x384xf32>
    %62 = arith.divf %60, %61 : vector<1x384xf32>
    %63 = vector.extract_strided_slice %62 {offsets = [0, 0], sizes = [1, 40], strides = [1, 1]} : vector<1x384xf32> to vector<1x40xf32>
    %64 = vector.extract_strided_slice %62 {offsets = [0, 128], sizes = [1, 40], strides = [1, 1]} : vector<1x384xf32> to vector<1x40xf32>
    %65 = vector.extract_strided_slice %62 {offsets = [0, 256], sizes = [1, 40], strides = [1, 1]} : vector<1x384xf32> to vector<1x40xf32>
    %66 = vector.extract_strided_slice %56 {offsets = [0, 384], sizes = [1, 40], strides = [1, 1]} : vector<1x512xf32> to vector<1x40xf32>
    %67 = math.tanh %66 : vector<1x40xf32>
    %68 = arith.mulf %64, %49 : vector<1x40xf32>
    %69 = arith.mulf %63, %67 : vector<1x40xf32>
    %70 = arith.addf %68, %69 : vector<1x40xf32>
    %71 = math.tanh %70 : vector<1x40xf32>
    %72 = arith.mulf %65, %71 : vector<1x40xf32>
    %73 = vector.extract_strided_slice %7 {offsets = [3, 0], sizes = [1, 512], strides = [1, 1]} : vector<8x512xf32> to vector<1x512xf32>
    %74 = arith.truncf %72 : vector<1x40xf32> to vector<1x40xbf16>
    %c8_19 = arith.constant 8 : index
    %c0_20 = arith.constant 0 : index
    %75 = vector.load %arg2[%c8_19, %c0_20] : memref<88x512xbf16, #tpu.memory_space<vmem>>, vector<40x512xbf16>
    %cst_21 = arith.constant dense<0.000000e+00> : vector<1x512xf32>
    %76 = tpu.matmul %74, %75, %cst_21 {dimension_numbers = #tpu.dot_dimension_numbers<[1], [0], [0], [1], [0, 0, 1, 1], [], []>} : vector<1x40xbf16>, vector<40x512xbf16>, vector<1x512xf32> -> vector<1x512xf32>
    %77 = arith.addf %73, %76 : vector<1x512xf32>
    %78 = vector.extract_strided_slice %77 {offsets = [0, 0], sizes = [1, 384], strides = [1, 1]} : vector<1x512xf32> to vector<1x384xf32>
    %79 = arith.negf %78 : vector<1x384xf32>
    %80 = math.exp %79 : vector<1x384xf32>
    %cst_22 = arith.constant 1.000000e+00 : f32
    %81 = vector.broadcast %cst_22 : f32 to vector<1x384xf32>
    %82 = arith.addf %81, %80 : vector<1x384xf32>
    %83 = arith.divf %81, %82 : vector<1x384xf32>
    %84 = vector.extract_strided_slice %83 {offsets = [0, 0], sizes = [1, 40], strides = [1, 1]} : vector<1x384xf32> to vector<1x40xf32>
    %85 = vector.extract_strided_slice %83 {offsets = [0, 128], sizes = [1, 40], strides = [1, 1]} : vector<1x384xf32> to vector<1x40xf32>
    %86 = vector.extract_strided_slice %83 {offsets = [0, 256], sizes = [1, 40], strides = [1, 1]} : vector<1x384xf32> to vector<1x40xf32>
    %87 = vector.extract_strided_slice %77 {offsets = [0, 384], sizes = [1, 40], strides = [1, 1]} : vector<1x512xf32> to vector<1x40xf32>
    %88 = math.tanh %87 : vector<1x40xf32>
    %89 = arith.mulf %85, %70 : vector<1x40xf32>
    %90 = arith.mulf %84, %88 : vector<1x40xf32>
    %91 = arith.addf %89, %90 : vector<1x40xf32>
    %92 = math.tanh %91 : vector<1x40xf32>
    %93 = arith.mulf %86, %92 : vector<1x40xf32>
    %94 = vector.extract_strided_slice %7 {offsets = [4, 0], sizes = [1, 512], strides = [1, 1]} : vector<8x512xf32> to vector<1x512xf32>
    %95 = arith.truncf %93 : vector<1x40xf32> to vector<1x40xbf16>
    %c8_23 = arith.constant 8 : index
    %c0_24 = arith.constant 0 : index
    %96 = vector.load %arg2[%c8_23, %c0_24] : memref<88x512xbf16, #tpu.memory_space<vmem>>, vector<40x512xbf16>
    %cst_25 = arith.constant dense<0.000000e+00> : vector<1x512xf32>
    %97 = tpu.matmul %95, %96, %cst_25 {dimension_numbers = #tpu.dot_dimension_numbers<[1], [0], [0], [1], [0, 0, 1, 1], [], []>} : vector<1x40xbf16>, vector<40x512xbf16>, vector<1x512xf32> -> vector<1x512xf32>
    %98 = arith.addf %94, %97 : vector<1x512xf32>
    %99 = vector.extract_strided_slice %98 {offsets = [0, 0], sizes = [1, 384], strides = [1, 1]} : vector<1x512xf32> to vector<1x384xf32>
    %100 = arith.negf %99 : vector<1x384xf32>
    %101 = math.exp %100 : vector<1x384xf32>
    %cst_26 = arith.constant 1.000000e+00 : f32
    %102 = vector.broadcast %cst_26 : f32 to vector<1x384xf32>
    %103 = arith.addf %102, %101 : vector<1x384xf32>
    %104 = arith.divf %102, %103 : vector<1x384xf32>
    %105 = vector.extract_strided_slice %104 {offsets = [0, 0], sizes = [1, 40], strides = [1, 1]} : vector<1x384xf32> to vector<1x40xf32>
    %106 = vector.extract_strided_slice %104 {offsets = [0, 128], sizes = [1, 40], strides = [1, 1]} : vector<1x384xf32> to vector<1x40xf32>
    %107 = vector.extract_strided_slice %104 {offsets = [0, 256], sizes = [1, 40], strides = [1, 1]} : vector<1x384xf32> to vector<1x40xf32>
    %108 = vector.extract_strided_slice %98 {offsets = [0, 384], sizes = [1, 40], strides = [1, 1]} : vector<1x512xf32> to vector<1x40xf32>
    %109 = math.tanh %108 : vector<1x40xf32>
    %110 = arith.mulf %106, %91 : vector<1x40xf32>
    %111 = arith.mulf %105, %109 : vector<1x40xf32>
    %112 = arith.addf %110, %111 : vector<1x40xf32>
    %113 = math.tanh %112 : vector<1x40xf32>
    %114 = arith.mulf %107, %113 : vector<1x40xf32>
    %115 = vector.extract_strided_slice %7 {offsets = [5, 0], sizes = [1, 512], strides = [1, 1]} : vector<8x512xf32> to vector<1x512xf32>
    %116 = arith.truncf %114 : vector<1x40xf32> to vector<1x40xbf16>
    %c8_27 = arith.constant 8 : index
    %c0_28 = arith.constant 0 : index
    %117 = vector.load %arg2[%c8_27, %c0_28] : memref<88x512xbf16, #tpu.memory_space<vmem>>, vector<40x512xbf16>
    %cst_29 = arith.constant dense<0.000000e+00> : vector<1x512xf32>
    %118 = tpu.matmul %116, %117, %cst_29 {dimension_numbers = #tpu.dot_dimension_numbers<[1], [0], [0], [1], [0, 0, 1, 1], [], []>} : vector<1x40xbf16>, vector<40x512xbf16>, vector<1x512xf32> -> vector<1x512xf32>
    %119 = arith.addf %115, %118 : vector<1x512xf32>
    %120 = vector.extract_strided_slice %119 {offsets = [0, 0], sizes = [1, 384], strides = [1, 1]} : vector<1x512xf32> to vector<1x384xf32>
    %121 = arith.negf %120 : vector<1x384xf32>
    %122 = math.exp %121 : vector<1x384xf32>
    %cst_30 = arith.constant 1.000000e+00 : f32
    %123 = vector.broadcast %cst_30 : f32 to vector<1x384xf32>
    %124 = arith.addf %123, %122 : vector<1x384xf32>
    %125 = arith.divf %123, %124 : vector<1x384xf32>
    %126 = vector.extract_strided_slice %125 {offsets = [0, 0], sizes = [1, 40], strides = [1, 1]} : vector<1x384xf32> to vector<1x40xf32>
    %127 = vector.extract_strided_slice %125 {offsets = [0, 128], sizes = [1, 40], strides = [1, 1]} : vector<1x384xf32> to vector<1x40xf32>
    %128 = vector.extract_strided_slice %125 {offsets = [0, 256], sizes = [1, 40], strides = [1, 1]} : vector<1x384xf32> to vector<1x40xf32>
    %129 = vector.extract_strided_slice %119 {offsets = [0, 384], sizes = [1, 40], strides = [1, 1]} : vector<1x512xf32> to vector<1x40xf32>
    %130 = math.tanh %129 : vector<1x40xf32>
    %131 = arith.mulf %127, %112 : vector<1x40xf32>
    %132 = arith.mulf %126, %130 : vector<1x40xf32>
    %133 = arith.addf %131, %132 : vector<1x40xf32>
    %134 = math.tanh %133 : vector<1x40xf32>
    %135 = arith.mulf %128, %134 : vector<1x40xf32>
    %136 = vector.extract_strided_slice %7 {offsets = [6, 0], sizes = [1, 512], strides = [1, 1]} : vector<8x512xf32> to vector<1x512xf32>
    %137 = arith.truncf %135 : vector<1x40xf32> to vector<1x40xbf16>
    %c8_31 = arith.constant 8 : index
    %c0_32 = arith.constant 0 : index
    %138 = vector.load %arg2[%c8_31, %c0_32] : memref<88x512xbf16, #tpu.memory_space<vmem>>, vector<40x512xbf16>
    %cst_33 = arith.constant dense<0.000000e+00> : vector<1x512xf32>
    %139 = tpu.matmul %137, %138, %cst_33 {dimension_numbers = #tpu.dot_dimension_numbers<[1], [0], [0], [1], [0, 0, 1, 1], [], []>} : vector<1x40xbf16>, vector<40x512xbf16>, vector<1x512xf32> -> vector<1x512xf32>
    %140 = arith.addf %136, %139 : vector<1x512xf32>
    %141 = vector.extract_strided_slice %140 {offsets = [0, 0], sizes = [1, 384], strides = [1, 1]} : vector<1x512xf32> to vector<1x384xf32>
    %142 = arith.negf %141 : vector<1x384xf32>
    %143 = math.exp %142 : vector<1x384xf32>
    %cst_34 = arith.constant 1.000000e+00 : f32
    %144 = vector.broadcast %cst_34 : f32 to vector<1x384xf32>
    %145 = arith.addf %144, %143 : vector<1x384xf32>
    %146 = arith.divf %144, %145 : vector<1x384xf32>
    %147 = vector.extract_strided_slice %146 {offsets = [0, 0], sizes = [1, 40], strides = [1, 1]} : vector<1x384xf32> to vector<1x40xf32>
    %148 = vector.extract_strided_slice %146 {offsets = [0, 128], sizes = [1, 40], strides = [1, 1]} : vector<1x384xf32> to vector<1x40xf32>
    %149 = vector.extract_strided_slice %146 {offsets = [0, 256], sizes = [1, 40], strides = [1, 1]} : vector<1x384xf32> to vector<1x40xf32>
    %150 = vector.extract_strided_slice %140 {offsets = [0, 384], sizes = [1, 40], strides = [1, 1]} : vector<1x512xf32> to vector<1x40xf32>
    %151 = math.tanh %150 : vector<1x40xf32>
    %152 = arith.mulf %148, %133 : vector<1x40xf32>
    %153 = arith.mulf %147, %151 : vector<1x40xf32>
    %154 = arith.addf %152, %153 : vector<1x40xf32>
    %155 = math.tanh %154 : vector<1x40xf32>
    %156 = arith.mulf %149, %155 : vector<1x40xf32>
    %157 = vector.extract_strided_slice %7 {offsets = [7, 0], sizes = [1, 512], strides = [1, 1]} : vector<8x512xf32> to vector<1x512xf32>
    %158 = arith.truncf %156 : vector<1x40xf32> to vector<1x40xbf16>
    %c8_35 = arith.constant 8 : index
    %c0_36 = arith.constant 0 : index
    %159 = vector.load %arg2[%c8_35, %c0_36] : memref<88x512xbf16, #tpu.memory_space<vmem>>, vector<40x512xbf16>
    %cst_37 = arith.constant dense<0.000000e+00> : vector<1x512xf32>
    %160 = tpu.matmul %158, %159, %cst_37 {dimension_numbers = #tpu.dot_dimension_numbers<[1], [0], [0], [1], [0, 0, 1, 1], [], []>} : vector<1x40xbf16>, vector<40x512xbf16>, vector<1x512xf32> -> vector<1x512xf32>
    %161 = arith.addf %157, %160 : vector<1x512xf32>
    %162 = vector.extract_strided_slice %161 {offsets = [0, 0], sizes = [1, 384], strides = [1, 1]} : vector<1x512xf32> to vector<1x384xf32>
    %163 = arith.negf %162 : vector<1x384xf32>
    %164 = math.exp %163 : vector<1x384xf32>
    %cst_38 = arith.constant 1.000000e+00 : f32
    %165 = vector.broadcast %cst_38 : f32 to vector<1x384xf32>
    %166 = arith.addf %165, %164 : vector<1x384xf32>
    %167 = arith.divf %165, %166 : vector<1x384xf32>
    %168 = vector.extract_strided_slice %167 {offsets = [0, 0], sizes = [1, 40], strides = [1, 1]} : vector<1x384xf32> to vector<1x40xf32>
    %169 = vector.extract_strided_slice %167 {offsets = [0, 128], sizes = [1, 40], strides = [1, 1]} : vector<1x384xf32> to vector<1x40xf32>
    %170 = vector.extract_strided_slice %167 {offsets = [0, 256], sizes = [1, 40], strides = [1, 1]} : vector<1x384xf32> to vector<1x40xf32>
    %171 = vector.extract_strided_slice %161 {offsets = [0, 384], sizes = [1, 40], strides = [1, 1]} : vector<1x512xf32> to vector<1x40xf32>
    %172 = math.tanh %171 : vector<1x40xf32>
    %173 = arith.mulf %169, %154 : vector<1x40xf32>
    %174 = arith.mulf %168, %172 : vector<1x40xf32>
    %175 = arith.addf %173, %174 : vector<1x40xf32>
    %176 = math.tanh %175 : vector<1x40xf32>
    %177 = arith.mulf %170, %176 : vector<1x40xf32>
    %178 = arith.truncf %177 : vector<1x40xf32> to vector<1x40xbf16>
    %c48 = arith.constant 48 : index
    %c0_39 = arith.constant 0 : index
    %179 = vector.load %arg2[%c48, %c0_39] : memref<88x512xbf16, #tpu.memory_space<vmem>>, vector<40x128xbf16>
    %cst_40 = arith.constant dense<0.000000e+00> : vector<1x128xf32>
    %180 = tpu.matmul %178, %179, %cst_40 {dimension_numbers = #tpu.dot_dimension_numbers<[1], [0], [0], [1], [0, 0, 1, 1], [], []>} : vector<1x40xbf16>, vector<40x128xbf16>, vector<1x128xf32> -> vector<1x128xf32>
    %c3 = arith.constant 3 : index
    %c0_41 = arith.constant 0 : index
    %181 = vector.load %arg3[%c3, %c0_41] : memref<4x512xf32, #tpu.memory_space<vmem>>, vector<1x128xf32>
    %182 = arith.addf %180, %181 : vector<1x128xf32>
    %c0_42 = arith.constant 0 : index
    %c0_43 = arith.constant 0 : index
    %c0_44 = arith.constant 0 : index
    %183 = vector.load %arg4[%c0_42, %c0_43, %c0_44] : memref<1x1x128xf32, #tpu.memory_space<vmem>>, vector<1x1x128xf32>
    %184 = vector.shape_cast %183 : vector<1x1x128xf32> to vector<1x128xf32>
    %185 = vector.shape_cast %182 : vector<1x128xf32> to vector<1x1x128xf32>
    tpu.vector_store %arg4[%c0_42, %c0_43, %c0_44], %185 {strides = array<i32>} : memref<1x1x128xf32, #tpu.memory_space<vmem>>, vector<1x1x128xf32>,
    return
  }
  func.func @transform_0(%arg0: i32) -> (i32, i32, i32) {
    %c0_i32 = arith.constant 0 : i32
    %c0_i32_0 = arith.constant 0 : i32
    %c0_i32_1 = arith.constant 0 : i32
    return %arg0, %c0_i32, %c0_i32_0 : i32, i32, i32
  }
  func.func @transform_1(%arg0: i32) -> (i32, i32) {
    %c0_i32 = arith.constant 0 : i32
    %c0_i32_0 = arith.constant 0 : i32
    %c0_i32_1 = arith.constant 0 : i32
    return %c0_i32, %c0_i32_0 : i32, i32
  }
  func.func @transform_2(%arg0: i32) -> (i32, i32) {
    %c0_i32 = arith.constant 0 : i32
    %c0_i32_0 = arith.constant 0 : i32
    %c0_i32_1 = arith.constant 0 : i32
    return %c0_i32, %c0_i32_0 : i32, i32
  }
  func.func @transform_3(%arg0: i32) -> (i32, i32, i32) {
    %c0_i32 = arith.constant 0 : i32
    %c0_i32_0 = arith.constant 0 : i32
    %c0_i32_1 = arith.constant 0 : i32
    return %arg0, %c0_i32, %c0_i32_0 : i32, i32, i32
  }
}

</mosaic_0001>

<llo_original>
// kernel: tpu_custom_call.1
$region0: #{tpu_custom_call.1}
  #allocation0 [shape = 'u32[]', space=smem, size = 0x4, offset = 0x4, fixed_abs, tag = 'smem constant byte address 0x4 - core index']
  #allocation1 [shape = 'u32[144,128]{1,0:T(1,128)}', space=vmem, size = 0x12000, scoped, tag = 'internal scratch']
  %s0 = inlined_call_operand.hbm [shape: f32[4,8,8], index: 0, kind: input, shape index: {}]
  %s1 = inlined_call_operand.hbm [shape: bf16[88,512], index: 1, kind: input, shape index: {}]
  %s2 = inlined_call_operand.hbm [shape: f32[4,512], index: 2, kind: input, shape index: {}]
  %s3 = inlined_call_operand.hbm [shape: f32[4,1,128], index: 3, kind: output, shape index: {}]
  %s4 = sld [smem:[#allocation0]]
  $region57: #{tpu_custom_call.1} parent=0
    _
  %s6 = ssub.s32 1, %s4
  %s7 = scalar_select 0, %s6, %s4
  $region1: #{tpu_custom_call.1} parent=0
    #allocation2 [shape = 'u8[8192]{0}', space=vmem, size = 0x2000, scoped, tag = 'input window, operand 0']
    #allocation3 [shape = 's32[2]{0}', space=sflag, size = 0x8, scoped, tag = 'scoped memory for tpu_custom_call.1']
    #allocation4 [shape = 's32[2]{0}', space=sflag, size = 0x8, scoped, tag = 'scoped memory for tpu_custom_call.1']
    #allocation5 [shape = 'u8[90112]{0}', space=vmem, size = 0x16000, scoped, tag = 'input window, operand 1, single buffered']
    #allocation6 [shape = 's32[1]{0}', space=sflag, size = 0x4, scoped, tag = 'scoped memory for tpu_custom_call.1']
    #allocation7 [shape = 'u8[8192]{0}', space=vmem, size = 0x2000, scoped, tag = 'input window, operand 2, single buffered']
    #allocation8 [shape = 'u8[1024]{0}', space=vmem, size = 0x400, scoped, tag = 'output window, operand 0']
    %8 = vsyncpa [#allocation3], 0
    %s9 = scalar_lea.sflag [#allocation3], 1
    %10 = vsyncpa %s9, 0
    %11 = vsyncpa [#allocation6], 0
    %12 = vsyncpa [#allocation4], 0
    %s13 = scalar_lea.sflag [#allocation4], 1
    %14 = vsyncpa %s13, 0
    loop: start=0, step=1, limit=6
    $region2: #{tpu_custom_call.1} parent=1 // loop_pre_header
      _
    $region3: #{tpu_custom_call.1} parent=1 // loop_header
      %s16 = sphi 0, %s20
      %p17 = scmp.ge.s32.totalorder %s16, 6
      %s26 = sphi 0, %s28
      %s29 = sphi 0, %s26
      %s30 = sphi 0, %s29
      %s46 = sphi 0, %s30
      %s50 = sphi 0, %s50
      %s52 = sphi 0, %s50
      %s53 = sphi 0, %s52
      %s67 = sphi 0, %s53
      %s71 = sphi 0, %s71
      %s73 = sphi 0, %s71
      %s74 = sphi 0, %s73
      %s88 = sphi 0, %s74
      %s94 = sphi 0, %s96
      %s97 = sphi 0, %s94
      %s98 = sphi 0, %s97
      %s114 = sphi 0, %s98
    $region4: #{tpu_custom_call.1} parent=1 // loop_header_branch
      %19 = sbr.rel (%p17) target = $region8
    $region5: #{tpu_custom_call.1} parent=1 // loop_body
      %s21 = ssub.s32 %s16, 1
      %s22 = ssub.s32 %s16, 2
      %s23 = sadd.s32 %s16, 1
      %s24 = ssub.s32 %s16, %s23
      %p25 = scmp.eq.s32.totalorder %s24, 0
      %s27 = sadd.s32 %s26, 1
      %s28 = scalar_select %p25, %s26, %s27
      %p31 = pneg %p25
      %p32 = scmp.eq.s32.totalorder %s16, 3
      %p33 = por %p31, %p32
      %p34 = scmp.ne.s32.totalorder %s26, %s29
      %p35 = scmp.eq.s32.totalorder %s16, 0
      %p36 = por %p34, %p35
      %p37 = scmp.ne.s32.totalorder %s26, %s29
      %p38 = scmp.eq.s32.totalorder %s21, 3
      %p39 = por %p37, %p38
      %p40 = scmp.ne.s32.totalorder %s29, %s30
      %p41 = scmp.eq.s32.totalorder %s21, 0
      %p42 = por %p40, %p41
      %p43 = scmp.ne.s32.totalorder %s29, %s30
      %p44 = scmp.eq.s32.totalorder %s22, 3
      %p45 = por %p43, %p44
      %p47 = scmp.ne.s32.totalorder %s30, %s46
      %p48 = scmp.eq.s32.totalorder %s22, 0
      %p49 = por %p47, %p48
      %s51 = sadd.s32 %s50, 1
      %p54 = scmp.eq.s32.totalorder %s16, 3
      %p55 = scmp.ne.s32.totalorder %s50, %s52
      %p56 = scmp.eq.s32.totalorder %s16, 0
      %p57 = por %p55, %p56
      %p58 = scmp.ne.s32.totalorder %s50, %s52
      %p59 = scmp.eq.s32.totalorder %s21, 3
      %p60 = por %p58, %p59
      %p61 = scmp.ne.s32.totalorder %s52, %s53
      %p62 = scmp.eq.s32.totalorder %s21, 0
      %p63 = por %p61, %p62
      %p64 = scmp.ne.s32.totalorder %s52, %s53
      %p65 = scmp.eq.s32.totalorder %s22, 3
      %p66 = por %p64, %p65
      %p68 = scmp.ne.s32.totalorder %s53, %s67
      %p69 = scmp.eq.s32.totalorder %s22, 0
      %p70 = por %p68, %p69
      %s72 = sadd.s32 %s71, 1
      %p75 = scmp.eq.s32.totalorder %s16, 3
      %p76 = scmp.ne.s32.totalorder %s71, %s73
      %p77 = scmp.eq.s32.totalorder %s16, 0
      %p78 = por %p76, %p77
      %p79 = scmp.ne.s32.totalorder %s71, %s73
      %p80 = scmp.eq.s32.totalorder %s21, 3
      %p81 = por %p79, %p80
      %p82 = scmp.ne.s32.totalorder %s73, %s74
      %p83 = scmp.eq.s32.totalorder %s21, 0
      %p84 = por %p82, %p83
      %p85 = scmp.ne.s32.totalorder %s73, %s74
      %p86 = scmp.eq.s32.totalorder %s22, 3
      %p87 = por %p85, %p86
      %p89 = scmp.ne.s32.totalorder %s74, %s88
      %p90 = scmp.eq.s32.totalorder %s22, 0
      %p91 = por %p89, %p90
      %s92 = ssub.s32 %s16, %s23
      %p93 = scmp.eq.s32.totalorder %s92, 0
      %s95 = sadd.s32 %s94, 1
      %s96 = scalar_select %p93, %s94, %s95
      %p99 = pneg %p93
      %p100 = scmp.eq.s32.totalorder %s16, 3
      %p101 = por %p99, %p100
      %p102 = scmp.ne.s32.totalorder %s94, %s97
      %p103 = scmp.eq.s32.totalorder %s16, 0
      %p104 = por %p102, %p103
      %p105 = scmp.ne.s32.totalorder %s94, %s97
      %p106 = scmp.eq.s32.totalorder %s21, 3
      %p107 = por %p105, %p106
      %p108 = scmp.ne.s32.totalorder %s97, %s98
      %p109 = scmp.eq.s32.totalorder %s21, 0
      %p110 = por %p108, %p109
      %p111 = scmp.ne.s32.totalorder %s97, %s98
      %p112 = scmp.eq.s32.totalorder %s22, 3
      %p113 = por %p111, %p112
      %p115 = scmp.ne.s32.totalorder %s98, %s114
      %p116 = scmp.eq.s32.totalorder %s22, 0
      %p117 = por %p115, %p116
      %p118 = scmp.le.s32.totalorder 1, %s16
      %p119 = scmp.lt.s32.totalorder %s16, 5
      %p120 = pnand %p118, %p119
      %p121 = pneg %p120
      // Predicated region
      $region9: #{tpu_custom_call.1} parent=5 // pred_check
        _
      $region10: #{tpu_custom_call.1} parent=5 // pred_check_branch
        %123 = sbr.rel (%p120) target = $region12
      $region11: #{tpu_custom_call.1} parent=5 // pred_region
        %s124 = ssub.s32 %s16, 1
        // Predicated region
        $region13: #{tpu_custom_call.1} parent=11 // pred_check
          %p125 = pneg %p63
        $region14: #{tpu_custom_call.1} parent=11 // pred_check_branch
          %127 = sbr.rel (%p125) target = $region16
        $region15: #{tpu_custom_call.1} parent=11 // pred_region
          %s129 = ssub.s32 2816, 2816
          %130 = vsyncadd [#allocation6], %s129
          %s131 = sshll.u32 [#allocation5], 4
          %s132 = int_to_ptr.vmem [resolvable:$true] %s131
          %137 = dma.hbm_to_vmem [thread:$0]  %s1, 2816, %s132, [#allocation6], 256, 256, 16
        $region16: #{tpu_custom_call.1} parent=11 // pred_fallthru
          _
        // Predicated region
        $region17: #{tpu_custom_call.1} parent=11 // pred_check
          %p138 = pneg %p84
        $region18: #{tpu_custom_call.1} parent=11 // pred_check_branch
          %140 = sbr.rel (%p138) target = $region20
        $region19: #{tpu_custom_call.1} parent=11 // pred_region
          %s142 = ssub.s32 256, 256
          %143 = vsyncadd [#allocation6], %s142
          %s145 = sshll.u32 [#allocation7], 4
          %s146 = int_to_ptr.vmem [resolvable:$true] %s145
          %148 = dma.hbm_to_vmem [thread:$0]  %s2, 256, %s146, [#allocation6]
        $region20: #{tpu_custom_call.1} parent=11 // pred_fallthru
          _
      $region12: #{tpu_custom_call.1} parent=5 // pred_fallthru
        _
      %p149 = scmp.lt.s32.totalorder %s16, 4
      // Predicated region
      $region21: #{tpu_custom_call.1} parent=5 // pred_check
        %p150 = pneg %p149
      $region22: #{tpu_custom_call.1} parent=5 // pred_check_branch
        %152 = sbr.rel (%p150) target = $region24
      $region23: #{tpu_custom_call.1} parent=5 // pred_region
        // Predicated region
        $region25: #{tpu_custom_call.1} parent=23 // pred_check
          %p153 = pneg %p36
        $region26: #{tpu_custom_call.1} parent=23 // pred_check_branch
          %155 = sbr.rel (%p153) target = $region28
        $region27: #{tpu_custom_call.1} parent=23 // pred_region
          %s156 = sand.u32 %s26, 1
          %s157 = scalar_lea.sflag [#allocation3], %s156
          %s158 = sand.u32 %s26, 1
          %s159 = smul.addr %s158, 8
          %s160 = scalar_lea.vmem [#allocation2], %s159
          %s162 = ssub.s32 128, 128
          %163 = vsyncadd %s157, %s162
          %s164 = smul.addr %s16, 128
          %s165 = scalar_lea.hbm %s0, %s164
          %s167 = sshll.u32 %s160, 4
          %s168 = int_to_ptr.vmem [resolvable:$true] %s167
          %170 = dma.hbm_to_vmem [thread:$0]  %s165, 128, %s168, %s157
        $region28: #{tpu_custom_call.1} parent=23 // pred_fallthru
          _
      $region24: #{tpu_custom_call.1} parent=5 // pred_fallthru
        _
      %p171 = scmp.le.s32.totalorder 1, %s16
      %p172 = scmp.lt.s32.totalorder %s16, 5
      %p173 = pnand %p171, %p172
      %p174 = pneg %p173
      // Predicated region
      $region29: #{tpu_custom_call.1} parent=5 // pred_check
        _
      $region30: #{tpu_custom_call.1} parent=5 // pred_check_branch
        %176 = sbr.rel (%p173) target = $region32
      $region31: #{tpu_custom_call.1} parent=5 // pred_region
        %s177 = ssub.s32 %s16, 1
        %s178 = sand.u32 %s29, 1
        %s179 = scalar_lea.sflag [#allocation3], %s178
        %s180 = sand.u32 %s29, 1
        %s181 = smul.addr %s180, 8
        %s182 = scalar_lea.vmem [#allocation2], %s181
        // Predicated region
        $region33: #{tpu_custom_call.1} parent=31 // pred_check
          %p183 = pneg %p42
        $region34: #{tpu_custom_call.1} parent=31 // pred_check_branch
          %185 = sbr.rel (%p183) target = $region36
        $region35: #{tpu_custom_call.1} parent=31 // pred_region
          %186 = dma.done %s179, 128
        $region36: #{tpu_custom_call.1} parent=31 // pred_fallthru
          _
        // Predicated region
        $region37: #{tpu_custom_call.1} parent=31 // pred_check
          %p187 = pneg %p63
        $region38: #{tpu_custom_call.1} parent=31 // pred_check_branch
          %189 = sbr.rel (%p187) target = $region40
        $region39: #{tpu_custom_call.1} parent=31 // pred_region
          %190 = dma.done [#allocation6], 2816
        $region40: #{tpu_custom_call.1} parent=31 // pred_fallthru
          _
        // Predicated region
        $region41: #{tpu_custom_call.1} parent=31 // pred_check
          %p191 = pneg %p84
        $region42: #{tpu_custom_call.1} parent=31 // pred_check_branch
          %193 = sbr.rel (%p191) target = $region44
        $region43: #{tpu_custom_call.1} parent=31 // pred_region
          %194 = dma.done [#allocation6], 256
        $region44: #{tpu_custom_call.1} parent=31 // pred_fallthru
          _
        %s195 = sand.u32 %s29, 1
        %s196 = scalar_lea.sflag [#allocation3], %s195
        %s197 = sand.u32 %s29, 1
        %s198 = smul.addr %s197, 8
        %s199 = scalar_lea.vmem [#allocation2], %s198
        %p200 = pneg %p42
        %p201 = pneg %p39
        %p202 = pneg %p63
        %p203 = pneg %p60
        %p204 = pneg %p84
        %p205 = pneg %p81
        %p206 = pneg %p110
        %p207 = pneg %p107
        %s208 = sand.u32 %s97, 1
        %s209 = scalar_lea.sflag [#allocation4], %s208
        %s210 = sand.u32 %s97, 1
        %s211 = scalar_lea.vmem [#allocation8], %s210
        %v213 = vld [vmem:[%s182] sm:$0xff]
        %v214 = vpack.c.bf16 %v213, %v213
        %v215 = vld [vmem:[#allocation7] ss:$4 sm:$0xf]
        %v216 = vld [vmem:[#allocation5] sm:$0xff]
        %v217 = vld [vmem:[#allocation5 + $0x8] sm:$0xff]
        %v219 = vlaneseq
        %v220 = vshrl.u32 %v219, 7
        %v221 = vsub.s32 0, %v220
        %v222 = vrot.slane %v215, %v221
        %v223 = vlaneseq
        %v224 = vshrl.u32 %v223, 7
        %v225 = vsub.s32 1, %v224
        %v226 = vrot.slane %v215, %v225
        %v227 = vlaneseq
        %v228 = vshrl.u32 %v227, 7
        %v229 = vsub.s32 2, %v228
        %v230 = vrot.slane %v215, %v229
        %v231 = vlaneseq
        %v232 = vshrl.u32 %v231, 7
        %v233 = vsub.s32 3, %v232
        %v234 = vrot.slane %v215, %v233
        %v241 = vunpack.c.l.b16 %v216
        %v242 = vunpack.c.h.b16 %v216
        %v243 = vunpack.c.l.b16 %v217
        %v244 = vunpack.c.h.b16 %v217
        %v245 = vpack.c.b16 %v241, %v241
        %v246 = vpack.c.b16 %v242, %v242
        %v247 = vpack.c.b16 %v243, %v243
        %v248 = vpack.c.b16 %v244, %v244
        %vm249 = vcmask 64512
        %v251 = vsel %vm249, %v214, 0
        %vm253 = vcmask 1043456
        %v255 = vsel %vm253, %v245, 0
        %v258 = vsel %vm253, %v246, 0
        %v261 = vsel %vm253, %v247, 0
        %v264 = vsel %vm253, %v248, 0
        %266 = vmatprep.subr.bf16.mxu0 0
        %267 = vmatpush1.bf16.msra.mxu0 0
        %268 = vmatprep.subr.bf16.mxu0 0
        %269 = vmatpush1.bf16.msra.mxu0 0
        %270 = vmatprep.subr.bf16.mxu0 0
        %271 = vmatpush1.bf16.msra.mxu0 0
        %272 = vmatprep.subr.bf16.mxu0 0
        %273 = vmatpush1.bf16.msra.mxu0 0
        %274 = vmatprep.subr.bf16.mxu0 0
        %275 = vmatpush1.bf16.msra.mxu0 0
        %276 = vmatprep.subr.bf16.mxu0 0
        %277 = vmatpush1.bf16.msra.mxu0 0
        %278 = vmatprep.subr.bf16.mxu0 0
        %279 = vmatpush1.bf16.msra.mxu0 0
        %280 = vmatprep.subr.bf16.mxu0 %v258
        %281 = vmatpush1.bf16.msra.mxu0 %v255
        %282 = vmatprep.subr.bf16.mxu0 0
        %283 = vmatpush2.bf16.msra.mxu0 0
        %284 = vmatprep.subr.bf16.mxu0 0
        %285 = vmatpush2.bf16.msra.mxu0 0
        %286 = vmatprep.subr.bf16.mxu0 0
        %287 = vmatpush2.bf16.msra.mxu0 0
        %288 = vmatprep.subr.bf16.mxu0 0
        %289 = vmatpush2.bf16.msra.mxu0 0
        %290 = vmatprep.subr.bf16.mxu0 0
        %291 = vmatpush2.bf16.msra.mxu0 0
        %292 = vmatprep.subr.bf16.mxu0 0
        %293 = vmatpush2.bf16.msra.mxu0 0
        %294 = vmatprep.subr.bf16.mxu0 0
        %295 = vmatpush2.bf16.msra.mxu0 0
        %296 = vmatprep.subr.bf16.mxu0 0
        %297 = vmatpush2.bf16.msra.mxu0 0
        %298 = vmatprep.mubr.bf16.mxu0 0
        %299 = vmatmul.mubr.bf16.gmra.mxu0 %v251
        %v300 = vpop.f32.mrf.mxu0
        %v301 = vadd.f32 %v222, %v300
        %v302 = vpop.f32.mrf.mxu0
        %v303 = vadd.f32 %v226, %v302
        %v304 = vpop.f32.mrf.mxu0
        %v305 = vpop.f32.mrf.mxu0
        %306 = vdwg.mxu0
        %307 = vmatprep.subr.bf16.mxu0 0
        %308 = vmatpush1.bf16.msra.mxu0 0
        %309 = vmatprep.subr.bf16.mxu0 0
        %310 = vmatpush1.bf16.msra.mxu0 0
        %311 = vmatprep.subr.bf16.mxu0 0
        %312 = vmatpush1.bf16.msra.mxu0 0
        %313 = vmatprep.subr.bf16.mxu0 0
        %314 = vmatpush1.bf16.msra.mxu0 0
        %315 = vmatprep.subr.bf16.mxu0 0
        %316 = vmatpush1.bf16.msra.mxu0 0
        %317 = vmatprep.subr.bf16.mxu0 0
        %318 = vmatpush1.bf16.msra.mxu0 0
        %319 = vmatprep.subr.bf16.mxu0 0
        %320 = vmatpush1.bf16.msra.mxu0 0
        %321 = vmatprep.subr.bf16.mxu0 %v264
        %322 = vmatpush1.bf16.msra.mxu0 %v261
        %323 = vmatprep.subr.bf16.mxu0 0
        %324 = vmatpush2.bf16.msra.mxu0 0
        %325 = vmatprep.subr.bf16.mxu0 0
        %326 = vmatpush2.bf16.msra.mxu0 0
        %327 = vmatprep.subr.bf16.mxu0 0
        %328 = vmatpush2.bf16.msra.mxu0 0
        %329 = vmatprep.subr.bf16.mxu0 0
        %330 = vmatpush2.bf16.msra.mxu0 0
        %331 = vmatprep.subr.bf16.mxu0 0
        %332 = vmatpush2.bf16.msra.mxu0 0
        %333 = vmatprep.subr.bf16.mxu0 0
        %334 = vmatpush2.bf16.msra.mxu0 0
        %335 = vmatprep.subr.bf16.mxu0 0
        %336 = vmatpush2.bf16.msra.mxu0 0
        %337 = vmatprep.subr.bf16.mxu0 0
        %338 = vmatpush2.bf16.msra.mxu0 0
        %339 = vmatprep.mubr.bf16.mxu0 0
        %340 = vmatmul.mubr.bf16.gmra.mxu0 %v251
        %v341 = vpop.f32.mrf.mxu0
        %v342 = vadd.f32 %v230, %v341
        %v343 = vpop.f32.mrf.mxu0
        %v344 = vadd.f32 %v234, %v343
        %v345 = vpop.f32.mrf.mxu0
        %v346 = vpop.f32.mrf.mxu0
        %347 = vdwg.mxu0
        %v348 = vld [vmem:[#allocation7 + $0x1] sm:$0x1]
        %v349 = vld [vmem:[#allocation7 + $0x2] sm:$0x1]
        %v350 = vpack.c.bf16 %v348, %v348
        %v351 = vld [vmem:[#allocation5 + $0x10] sm:$0xff]
        %v352 = vld [vmem:[#allocation5 + $0x18] sm:$0xff]
        %v353 = vld [vmem:[#allocation5 + $0x20] sm:$0xff]
        %v354 = vld [vmem:[#allocation5 + $0x28] sm:$0xff]
        %v355 = vld [vmem:[#allocation5 + $0x30] sm:$0xff]
        %v356 = vld [vmem:[#allocation5 + $0x38] sm:$0xff]
        %v357 = vld [vmem:[#allocation5 + $0x40] sm:$0xff]
        %v358 = vld [vmem:[#allocation5 + $0x48] sm:$0xff]
        %v359 = vld [vmem:[#allocation5 + $0x50] sm:$0xff]
        %v360 = vld [vmem:[#allocation5 + $0x58] sm:$0xff]
        %v371 = vunpack.c.l.b16 %v351
        %v372 = vunpack.c.h.b16 %v351
        %v373 = vunpack.c.l.b16 %v352
        %v374 = vunpack.c.h.b16 %v352
        %v375 = vunpack.c.l.b16 %v353
        %v376 = vunpack.c.h.b16 %v353
        %v377 = vunpack.c.l.b16 %v354
        %v378 = vunpack.c.h.b16 %v354
        %v379 = vunpack.c.l.b16 %v355
        %v380 = vunpack.c.h.b16 %v355
        %v381 = vunpack.c.l.b16 %v356
        %v382 = vunpack.c.h.b16 %v356
        %v383 = vunpack.c.l.b16 %v357
        %v384 = vunpack.c.h.b16 %v357
        %v385 = vunpack.c.l.b16 %v358
        %v386 = vunpack.c.h.b16 %v358
        %v387 = vunpack.c.l.b16 %v359
        %v388 = vunpack.c.h.b16 %v359
        %v389 = vunpack.c.l.b16 %v360
        %v390 = vunpack.c.h.b16 %v360
        %v391 = vpack.c.b16 %v375, %v371
        %v392 = vpack.c.b16 %v376, %v372
        %v393 = vpack.c.b16 %v377, %v373
        %v394 = vpack.c.b16 %v378, %v374
        %v395 = vpack.c.b16 %v383, %v379
        %v396 = vpack.c.b16 %v384, %v380
        %v397 = vpack.c.b16 %v385, %v381
        %v398 = vpack.c.b16 %v386, %v382
        %v399 = vpack.c.b16 %v387, %v387
        %v400 = vpack.c.b16 %v388, %v388
        %v401 = vpack.c.b16 %v389, %v389
        %v402 = vpack.c.b16 %v390, %v390
        %vm411 = vcmask 326656
        %v413 = vsel %vm411, %v350, 0
        %v416 = vsel %vm253, %v399, 0
        %v419 = vsel %vm253, %v400, 0
        %v422 = vsel %vm253, %v401, 0
        %v425 = vsel %vm253, %v402, 0
        %427 = vmatprep.subr.bf16.mxu0 0
        %428 = vmatpush1.bf16.msra.mxu0 0
        %429 = vmatprep.subr.bf16.mxu0 0
        %430 = vmatpush1.bf16.msra.mxu0 0
        %431 = vmatprep.subr.bf16.mxu0 0
        %432 = vmatpush1.bf16.msra.mxu0 0
        %433 = vmatprep.subr.bf16.mxu0 0
        %434 = vmatpush1.bf16.msra.mxu0 0
        %435 = vmatprep.subr.bf16.mxu0 0
        %436 = vmatpush1.bf16.msra.mxu0 0
        %437 = vmatprep.subr.bf16.mxu0 %v419
        %438 = vmatpush1.bf16.msra.mxu0 %v416
        %439 = vmatprep.subr.bf16.mxu0 %v396
        %440 = vmatpush1.bf16.msra.mxu0 %v395
        %441 = vmatprep.subr.bf16.mxu0 %v392
        %442 = vmatpush1.bf16.msra.mxu0 %v391
        %443 = vmatprep.subr.bf16.mxu0 0
        %444 = vmatpush2.bf16.msra.mxu0 0
        %445 = vmatprep.subr.bf16.mxu0 0
        %446 = vmatpush2.bf16.msra.mxu0 0
        %447 = vmatprep.subr.bf16.mxu0 0
        %448 = vmatpush2.bf16.msra.mxu0 0
        %449 = vmatprep.subr.bf16.mxu0 0
        %450 = vmatpush2.bf16.msra.mxu0 0
        %451 = vmatprep.subr.bf16.mxu0 0
        %452 = vmatpush2.bf16.msra.mxu0 0
        %453 = vmatprep.subr.bf16.mxu0 0
        %454 = vmatpush2.bf16.msra.mxu0 0
        %455 = vmatprep.subr.bf16.mxu0 0
        %456 = vmatpush2.bf16.msra.mxu0 0
        %457 = vmatprep.subr.bf16.mxu0 0
        %458 = vmatpush2.bf16.msra.mxu0 0
        %459 = vmatprep.mubr.bf16.mxu0 0
        %460 = vmatmul.mubr.bf16.gmra.mxu0 %v413
        %v461 = vpop.f32.mrf.mxu0
        %v462 = vadd.f32 0.0, %v461
        %v463 = vpop.f32.mrf.mxu0
        %v464 = vadd.f32 0.0, %v463
        %v465 = vpop.f32.mrf.mxu0
        %v466 = vpop.f32.mrf.mxu0
        %467 = vdwg.mxu0
        %468 = vmatprep.subr.bf16.mxu0 0
        %469 = vmatpush1.bf16.msra.mxu0 0
        %470 = vmatprep.subr.bf16.mxu0 0
        %471 = vmatpush1.bf16.msra.mxu0 0
        %472 = vmatprep.subr.bf16.mxu0 0
        %473 = vmatpush1.bf16.msra.mxu0 0
        %474 = vmatprep.subr.bf16.mxu0 0
        %475 = vmatpush1.bf16.msra.mxu0 0
        %476 = vmatprep.subr.bf16.mxu0 0
        %477 = vmatpush1.bf16.msra.mxu0 0
        %478 = vmatprep.subr.bf16.mxu0 %v425
        %479 = vmatpush1.bf16.msra.mxu0 %v422
        %480 = vmatprep.subr.bf16.mxu0 %v398
        %481 = vmatpush1.bf16.msra.mxu0 %v397
        %482 = vmatprep.subr.bf16.mxu0 %v394
        %483 = vmatpush1.bf16.msra.mxu0 %v393
        %484 = vmatprep.subr.bf16.mxu0 0
        %485 = vmatpush2.bf16.msra.mxu0 0
        %486 = vmatprep.subr.bf16.mxu0 0
        %487 = vmatpush2.bf16.msra.mxu0 0
        %488 = vmatprep.subr.bf16.mxu0 0
        %489 = vmatpush2.bf16.msra.mxu0 0
        %490 = vmatprep.subr.bf16.mxu0 0
        %491 = vmatpush2.bf16.msra.mxu0 0
        %492 = vmatprep.subr.bf16.mxu0 0
        %493 = vmatpush2.bf16.msra.mxu0 0
        %494 = vmatprep.subr.bf16.mxu0 0
        %495 = vmatpush2.bf16.msra.mxu0 0
        %496 = vmatprep.subr.bf16.mxu0 0
        %497 = vmatpush2.bf16.msra.mxu0 0
        %498 = vmatprep.subr.bf16.mxu0 0
        %499 = vmatpush2.bf16.msra.mxu0 0
        %500 = vmatprep.mubr.bf16.mxu0 0
        %501 = vmatmul.mubr.bf16.gmra.mxu0 %v413
        %v502 = vpop.f32.mrf.mxu0
        %v503 = vadd.f32 0.0, %v502
        %v504 = vpop.f32.mrf.mxu0
        %v505 = vadd.f32 0.0, %v504
        %v506 = vpop.f32.mrf.mxu0
        %v507 = vpop.f32.mrf.mxu0
        %508 = vdwg.mxu0
        %v509 = vadd.f32 %v301, %v462
        %v510 = vadd.f32 %v303, %v464
        %v511 = vadd.f32 %v342, %v503
        %v512 = vadd.f32 %v344, %v505
        %v513 = vxor.u32 %v509, 2147483648
        %v514 = vxor.u32 %v510, 2147483648
        %v515 = vxor.u32 %v511, 2147483648
        %v516 = vmul.f32 %v513, 1.442695
        %v517 = vpow.pop %v516
        %v518 = vmul.f32 %v514, 1.442695
        %v519 = vpow.pop %v518
        %v520 = vmul.f32 %v515, 1.442695
        %v521 = vpow.pop %v520
        %v522 = vadd.f32 %v517, 1.0
        %v523 = vadd.f32 %v519, 1.0
        %v524 = vadd.f32 %v521, 1.0
        %v525 = vrcp.pop %v522
        %v526 = vmul.f32 1.0, %v525
        %v527 = vrcp.pop %v523
        %v528 = vmul.f32 1.0, %v527
        %v529 = vrcp.pop %v524
        %v530 = vmul.f32 1.0, %v529
        %v531 = vtanh.pop %v512
        %v532 = vmul.f32 %v528, %v349
        %v533 = vmul.f32 %v526, %v531
        %v534 = vadd.f32 %v532, %v533
        %v535 = vtanh.pop %v534
        %v536 = vmul.f32 %v530, %v535
        %v537 = vpack.c.bf16 %v536, %v536
        %v539 = vsel %vm411, %v537, 0
        %541 = vmatprep.subr.bf16.mxu0 0
        %542 = vmatpush1.bf16.msra.mxu0 0
        %543 = vmatprep.subr.bf16.mxu0 0
        %544 = vmatpush1.bf16.msra.mxu0 0
        %545 = vmatprep.subr.bf16.mxu0 0
        %546 = vmatpush1.bf16.msra.mxu0 0
        %547 = vmatprep.subr.bf16.mxu0 0
        %548 = vmatpush1.bf16.msra.mxu0 0
        %549 = vmatprep.subr.bf16.mxu0 0
        %550 = vmatpush1.bf16.msra.mxu0 0
        %551 = vmatprep.subr.bf16.mxu0 %v419
        %552 = vmatpush1.bf16.msra.mxu0 %v416
        %553 = vmatprep.subr.bf16.mxu0 %v396
        %554 = vmatpush1.bf16.msra.mxu0 %v395
        %555 = vmatprep.subr.bf16.mxu0 %v392
        %556 = vmatpush1.bf16.msra.mxu0 %v391
        %557 = vmatprep.subr.bf16.mxu0 0
        %558 = vmatpush2.bf16.msra.mxu0 0
        %559 = vmatprep.subr.bf16.mxu0 0
        %560 = vmatpush2.bf16.msra.mxu0 0
        %561 = vmatprep.subr.bf16.mxu0 0
        %562 = vmatpush2.bf16.msra.mxu0 0
        %563 = vmatprep.subr.bf16.mxu0 0
        %564 = vmatpush2.bf16.msra.mxu0 0
        %565 = vmatprep.subr.bf16.mxu0 0
        %566 = vmatpush2.bf16.msra.mxu0 0
        %567 = vmatprep.subr.bf16.mxu0 0
        %568 = vmatpush2.bf16.msra.mxu0 0
        %569 = vmatprep.subr.bf16.mxu0 0
        %570 = vmatpush2.bf16.msra.mxu0 0
        %571 = vmatprep.subr.bf16.mxu0 0
        %572 = vmatpush2.bf16.msra.mxu0 0
        %573 = vmatprep.mubr.bf16.mxu0 0
        %574 = vmatmul.mubr.bf16.gmra.mxu0 %v539
        %v575 = vpop.f32.mrf.mxu0
        %v576 = vadd.f32 0.0, %v575
        %v577 = vpop.f32.mrf.mxu0
        %v578 = vadd.f32 0.0, %v577
        %v579 = vpop.f32.mrf.mxu0
        %v580 = vpop.f32.mrf.mxu0
        %581 = vdwg.mxu0
        %582 = vmatprep.subr.bf16.mxu0 0
        %583 = vmatpush1.bf16.msra.mxu0 0
        %584 = vmatprep.subr.bf16.mxu0 0
        %585 = vmatpush1.bf16.msra.mxu0 0
        %586 = vmatprep.subr.bf16.mxu0 0
        %587 = vmatpush1.bf16.msra.mxu0 0
        %588 = vmatprep.subr.bf16.mxu0 0
        %589 = vmatpush1.bf16.msra.mxu0 0
        %590 = vmatprep.subr.bf16.mxu0 0
        %591 = vmatpush1.bf16.msra.mxu0 0
        %592 = vmatprep.subr.bf16.mxu0 %v425
        %593 = vmatpush1.bf16.msra.mxu0 %v422
        %594 = vmatprep.subr.bf16.mxu0 %v398
        %595 = vmatpush1.bf16.msra.mxu0 %v397
        %596 = vmatprep.subr.bf16.mxu0 %v394
        %597 = vmatpush1.bf16.msra.mxu0 %v393
        %598 = vmatprep.subr.bf16.mxu0 0
        %599 = vmatpush2.bf16.msra.mxu0 0
        %600 = vmatprep.subr.bf16.mxu0 0
        %601 = vmatpush2.bf16.msra.mxu0 0
        %602 = vmatprep.subr.bf16.mxu0 0
        %603 = vmatpush2.bf16.msra.mxu0 0
        %604 = vmatprep.subr.bf16.mxu0 0
        %605 = vmatpush2.bf16.msra.mxu0 0
        %606 = vmatprep.subr.bf16.mxu0 0
        %607 = vmatpush2.bf16.msra.mxu0 0
        %608 = vmatprep.subr.bf16.mxu0 0
        %609 = vmatpush2.bf16.msra.mxu0 0
        %610 = vmatprep.subr.bf16.mxu0 0
        %611 = vmatpush2.bf16.msra.mxu0 0
        %612 = vmatprep.subr.bf16.mxu0 0
        %613 = vmatpush2.bf16.msra.mxu0 0
        %614 = vmatprep.mubr.bf16.mxu0 0
        %615 = vmatmul.mubr.bf16.gmra.mxu0 %v539
        %v616 = vpop.f32.mrf.mxu0
        %v617 = vadd.f32 0.0, %v616
        %v618 = vpop.f32.mrf.mxu0
        %v619 = vadd.f32 0.0, %v618
        %v620 = vpop.f32.mrf.mxu0
        %v621 = vpop.f32.mrf.mxu0
        %622 = vdwg.mxu0
        %v627 = vrot.slane %v576, 7
        %v628 = vrot.slane %v578, 7
        %v629 = vrot.slane %v617, 7
        %v630 = vrot.slane %v619, 7
        %v635 = vadd.f32 %v301, %v627
        %v636 = vadd.f32 %v303, %v628
        %v637 = vadd.f32 %v342, %v629
        %v638 = vadd.f32 %v344, %v630
        %v639 = vxor.u32 %v635, 2147483648
        %v640 = vxor.u32 %v636, 2147483648
        %v641 = vxor.u32 %v637, 2147483648
        %v642 = vmul.f32 %v639, 1.442695
        %v643 = vpow.pop %v642
        %v644 = vmul.f32 %v640, 1.442695
        %v645 = vpow.pop %v644
        %v646 = vmul.f32 %v641, 1.442695
        %v647 = vpow.pop %v646
        %v648 = vadd.f32 %v643, 1.0
        %v649 = vadd.f32 %v645, 1.0
        %v650 = vadd.f32 %v647, 1.0
        %v651 = vrcp.pop %v648
        %v652 = vmul.f32 1.0, %v651
        %v653 = vrcp.pop %v649
        %v654 = vmul.f32 1.0, %v653
        %v655 = vrcp.pop %v650
        %v656 = vmul.f32 1.0, %v655
        %v657 = vtanh.pop %v638
        %v659 = vrot.slane %v534, 7
        %v661 = vmul.f32 %v654, %v659
        %v662 = vmul.f32 %v652, %v657
        %v663 = vadd.f32 %v661, %v662
        %v664 = vtanh.pop %v663
        %v665 = vmul.f32 %v656, %v664
        %v666 = vpack.c.bf16 %v665, %v665
        %v668 = vshrl.u32 %v666, 16
        %v671 = vsel %vm411, %v668, 0
        %673 = vmatprep.subr.bf16.mxu0 0
        %674 = vmatpush1.bf16.msra.mxu0 0
        %675 = vmatprep.subr.bf16.mxu0 0
        %676 = vmatpush1.bf16.msra.mxu0 0
        %677 = vmatprep.subr.bf16.mxu0 0
        %678 = vmatpush1.bf16.msra.mxu0 0
        %679 = vmatprep.subr.bf16.mxu0 0
        %680 = vmatpush1.bf16.msra.mxu0 0
        %681 = vmatprep.subr.bf16.mxu0 0
        %682 = vmatpush1.bf16.msra.mxu0 0
        %683 = vmatprep.subr.bf16.mxu0 %v419
        %684 = vmatpush1.bf16.msra.mxu0 %v416
        %685 = vmatprep.subr.bf16.mxu0 %v396
        %686 = vmatpush1.bf16.msra.mxu0 %v395
        %687 = vmatprep.subr.bf16.mxu0 %v392
        %688 = vmatpush1.bf16.msra.mxu0 %v391
        %689 = vmatprep.subr.bf16.mxu0 0
        %690 = vmatpush2.bf16.msra.mxu0 0
        %691 = vmatprep.subr.bf16.mxu0 0
        %692 = vmatpush2.bf16.msra.mxu0 0
        %693 = vmatprep.subr.bf16.mxu0 0
        %694 = vmatpush2.bf16.msra.mxu0 0
        %695 = vmatprep.subr.bf16.mxu0 0
        %696 = vmatpush2.bf16.msra.mxu0 0
        %697 = vmatprep.subr.bf16.mxu0 0
        %698 = vmatpush2.bf16.msra.mxu0 0
        %699 = vmatprep.subr.bf16.mxu0 0
        %700 = vmatpush2.bf16.msra.mxu0 0
        %701 = vmatprep.subr.bf16.mxu0 0
        %702 = vmatpush2.bf16.msra.mxu0 0
        %703 = vmatprep.subr.bf16.mxu0 0
        %704 = vmatpush2.bf16.msra.mxu0 0
        %705 = vmatprep.mubr.bf16.mxu0 0
        %706 = vmatmul.mubr.bf16.gmra.mxu0 %v671
        %v707 = vpop.f32.mrf.mxu0
        %v708 = vadd.f32 0.0, %v707
        %v709 = vpop.f32.mrf.mxu0
        %v710 = vadd.f32 0.0, %v709
        %v711 = vpop.f32.mrf.mxu0
        %v712 = vpop.f32.mrf.mxu0
        %713 = vdwg.mxu0
        %714 = vmatprep.subr.bf16.mxu0 0
        %715 = vmatpush1.bf16.msra.mxu0 0
        %716 = vmatprep.subr.bf16.mxu0 0
        %717 = vmatpush1.bf16.msra.mxu0 0
        %718 = vmatprep.subr.bf16.mxu0 0
        %719 = vmatpush1.bf16.msra.mxu0 0
        %720 = vmatprep.subr.bf16.mxu0 0
        %721 = vmatpush1.bf16.msra.mxu0 0
        %722 = vmatprep.subr.bf16.mxu0 0
        %723 = vmatpush1.bf16.msra.mxu0 0
        %724 = vmatprep.subr.bf16.mxu0 %v425
        %725 = vmatpush1.bf16.msra.mxu0 %v422
        %726 = vmatprep.subr.bf16.mxu0 %v398
        %727 = vmatpush1.bf16.msra.mxu0 %v397
        %728 = vmatprep.subr.bf16.mxu0 %v394
        %729 = vmatpush1.bf16.msra.mxu0 %v393
        %730 = vmatprep.subr.bf16.mxu0 0
        %731 = vmatpush2.bf16.msra.mxu0 0
        %732 = vmatprep.subr.bf16.mxu0 0
        %733 = vmatpush2.bf16.msra.mxu0 0
        %734 = vmatprep.subr.bf16.mxu0 0
        %735 = vmatpush2.bf16.msra.mxu0 0
        %736 = vmatprep.subr.bf16.mxu0 0
        %737 = vmatpush2.bf16.msra.mxu0 0
        %738 = vmatprep.subr.bf16.mxu0 0
        %739 = vmatpush2.bf16.msra.mxu0 0
        %740 = vmatprep.subr.bf16.mxu0 0
        %741 = vmatpush2.bf16.msra.mxu0 0
        %742 = vmatprep.subr.bf16.mxu0 0
        %743 = vmatpush2.bf16.msra.mxu0 0
        %744 = vmatprep.subr.bf16.mxu0 0
        %745 = vmatpush2.bf16.msra.mxu0 0
        %746 = vmatprep.mubr.bf16.mxu0 0
        %747 = vmatmul.mubr.bf16.gmra.mxu0 %v671
        %v748 = vpop.f32.mrf.mxu0
        %v749 = vadd.f32 0.0, %v748
        %v750 = vpop.f32.mrf.mxu0
        %v751 = vadd.f32 0.0, %v750
        %v752 = vpop.f32.mrf.mxu0
        %v753 = vpop.f32.mrf.mxu0
        %754 = vdwg.mxu0
        %v759 = vrot.slane %v708, 6
        %v760 = vrot.slane %v710, 6
        %v761 = vrot.slane %v749, 6
        %v762 = vrot.slane %v751, 6
        %v767 = vadd.f32 %v301, %v759
        %v768 = vadd.f32 %v303, %v760
        %v769 = vadd.f32 %v342, %v761
        %v770 = vadd.f32 %v344, %v762
        %v771 = vxor.u32 %v767, 2147483648
        %v772 = vxor.u32 %v768, 2147483648
        %v773 = vxor.u32 %v769, 2147483648
        %v774 = vmul.f32 %v771, 1.442695
        %v775 = vpow.pop %v774
        %v776 = vmul.f32 %v772, 1.442695
        %v777 = vpow.pop %v776
        %v778 = vmul.f32 %v773, 1.442695
        %v779 = vpow.pop %v778
        %v780 = vadd.f32 %v775, 1.0
        %v781 = vadd.f32 %v777, 1.0
        %v782 = vadd.f32 %v779, 1.0
        %v783 = vrcp.pop %v780
        %v784 = vmul.f32 1.0, %v783
        %v785 = vrcp.pop %v781
        %v786 = vmul.f32 1.0, %v785
        %v787 = vrcp.pop %v782
        %v788 = vmul.f32 1.0, %v787
        %v789 = vtanh.pop %v770
        %v791 = vrot.slane %v663, 7
        %v793 = vmul.f32 %v786, %v791
        %v794 = vmul.f32 %v784, %v789
        %v795 = vadd.f32 %v793, %v794
        %v796 = vtanh.pop %v795
        %v797 = vmul.f32 %v788, %v796
        %v798 = vpack.c.bf16 %v797, %v797
        %v800 = vrot.slane %v798, 1
        %v802 = vsel %vm411, %v800, 0
        %804 = vmatprep.subr.bf16.mxu0 0
        %805 = vmatpush1.bf16.msra.mxu0 0
        %806 = vmatprep.subr.bf16.mxu0 0
        %807 = vmatpush1.bf16.msra.mxu0 0
        %808 = vmatprep.subr.bf16.mxu0 0
        %809 = vmatpush1.bf16.msra.mxu0 0
        %810 = vmatprep.subr.bf16.mxu0 0
        %811 = vmatpush1.bf16.msra.mxu0 0
        %812 = vmatprep.subr.bf16.mxu0 0
        %813 = vmatpush1.bf16.msra.mxu0 0
        %814 = vmatprep.subr.bf16.mxu0 %v419
        %815 = vmatpush1.bf16.msra.mxu0 %v416
        %816 = vmatprep.subr.bf16.mxu0 %v396
        %817 = vmatpush1.bf16.msra.mxu0 %v395
        %818 = vmatprep.subr.bf16.mxu0 %v392
        %819 = vmatpush1.bf16.msra.mxu0 %v391
        %820 = vmatprep.subr.bf16.mxu0 0
        %821 = vmatpush2.bf16.msra.mxu0 0
        %822 = vmatprep.subr.bf16.mxu0 0
        %823 = vmatpush2.bf16.msra.mxu0 0
        %824 = vmatprep.subr.bf16.mxu0 0
        %825 = vmatpush2.bf16.msra.mxu0 0
        %826 = vmatprep.subr.bf16.mxu0 0
        %827 = vmatpush2.bf16.msra.mxu0 0
        %828 = vmatprep.subr.bf16.mxu0 0
        %829 = vmatpush2.bf16.msra.mxu0 0
        %830 = vmatprep.subr.bf16.mxu0 0
        %831 = vmatpush2.bf16.msra.mxu0 0
        %832 = vmatprep.subr.bf16.mxu0 0
        %833 = vmatpush2.bf16.msra.mxu0 0
        %834 = vmatprep.subr.bf16.mxu0 0
        %835 = vmatpush2.bf16.msra.mxu0 0
        %836 = vmatprep.mubr.bf16.mxu0 0
        %837 = vmatmul.mubr.bf16.gmra.mxu0 %v802
        %v838 = vpop.f32.mrf.mxu0
        %v839 = vadd.f32 0.0, %v838
        %v840 = vpop.f32.mrf.mxu0
        %v841 = vadd.f32 0.0, %v840
        %v842 = vpop.f32.mrf.mxu0
        %v843 = vpop.f32.mrf.mxu0
        %844 = vdwg.mxu0
        %845 = vmatprep.subr.bf16.mxu0 0
        %846 = vmatpush1.bf16.msra.mxu0 0
        %847 = vmatprep.subr.bf16.mxu0 0
        %848 = vmatpush1.bf16.msra.mxu0 0
        %849 = vmatprep.subr.bf16.mxu0 0
        %850 = vmatpush1.bf16.msra.mxu0 0
        %851 = vmatprep.subr.bf16.mxu0 0
        %852 = vmatpush1.bf16.msra.mxu0 0
        %853 = vmatprep.subr.bf16.mxu0 0
        %854 = vmatpush1.bf16.msra.mxu0 0
        %855 = vmatprep.subr.bf16.mxu0 %v425
        %856 = vmatpush1.bf16.msra.mxu0 %v422
        %857 = vmatprep.subr.bf16.mxu0 %v398
        %858 = vmatpush1.bf16.msra.mxu0 %v397
        %859 = vmatprep.subr.bf16.mxu0 %v394
        %860 = vmatpush1.bf16.msra.mxu0 %v393
        %861 = vmatprep.subr.bf16.mxu0 0
        %862 = vmatpush2.bf16.msra.mxu0 0
        %863 = vmatprep.subr.bf16.mxu0 0
        %864 = vmatpush2.bf16.msra.mxu0 0
        %865 = vmatprep.subr.bf16.mxu0 0
        %866 = vmatpush2.bf16.msra.mxu0 0
        %867 = vmatprep.subr.bf16.mxu0 0
        %868 = vmatpush2.bf16.msra.mxu0 0
        %869 = vmatprep.subr.bf16.mxu0 0
        %870 = vmatpush2.bf16.msra.mxu0 0
        %871 = vmatprep.subr.bf16.mxu0 0
        %872 = vmatpush2.bf16.msra.mxu0 0
        %873 = vmatprep.subr.bf16.mxu0 0
        %874 = vmatpush2.bf16.msra.mxu0 0
        %875 = vmatprep.subr.bf16.mxu0 0
        %876 = vmatpush2.bf16.msra.mxu0 0
        %877 = vmatprep.mubr.bf16.mxu0 0
        %878 = vmatmul.mubr.bf16.gmra.mxu0 %v802
        %v879 = vpop.f32.mrf.mxu0
        %v880 = vadd.f32 0.0, %v879
        %v881 = vpop.f32.mrf.mxu0
        %v882 = vadd.f32 0.0, %v881
        %v883 = vpop.f32.mrf.mxu0
        %v884 = vpop.f32.mrf.mxu0
        %885 = vdwg.mxu0
        %v890 = vrot.slane %v839, 5
        %v891 = vrot.slane %v841, 5
        %v892 = vrot.slane %v880, 5
        %v893 = vrot.slane %v882, 5
        %v898 = vadd.f32 %v301, %v890
        %v899 = vadd.f32 %v303, %v891
        %v900 = vadd.f32 %v342, %v892
        %v901 = vadd.f32 %v344, %v893
        %v902 = vxor.u32 %v898, 2147483648
        %v903 = vxor.u32 %v899, 2147483648
        %v904 = vxor.u32 %v900, 2147483648
        %v905 = vmul.f32 %v902, 1.442695
        %v906 = vpow.pop %v905
        %v907 = vmul.f32 %v903, 1.442695
        %v908 = vpow.pop %v907
        %v909 = vmul.f32 %v904, 1.442695
        %v910 = vpow.pop %v909
        %v911 = vadd.f32 %v906, 1.0
        %v912 = vadd.f32 %v908, 1.0
        %v913 = vadd.f32 %v910, 1.0
        %v914 = vrcp.pop %v911
        %v915 = vmul.f32 1.0, %v914
        %v916 = vrcp.pop %v912
        %v917 = vmul.f32 1.0, %v916
        %v918 = vrcp.pop %v913
        %v919 = vmul.f32 1.0, %v918
        %v920 = vtanh.pop %v901
        %v922 = vrot.slane %v795, 7
        %v924 = vmul.f32 %v917, %v922
        %v925 = vmul.f32 %v915, %v920
        %v926 = vadd.f32 %v924, %v925
        %v927 = vtanh.pop %v926
        %v928 = vmul.f32 %v919, %v927
        %v929 = vpack.c.bf16 %v928, %v928
        %v931 = vshrl.u32 %v929, 16
        %v933 = vrot.slane %v931, 1
        %v935 = vsel %vm411, %v933, 0
        %937 = vmatprep.subr.bf16.mxu0 0
        %938 = vmatpush1.bf16.msra.mxu0 0
        %939 = vmatprep.subr.bf16.mxu0 0
        %940 = vmatpush1.bf16.msra.mxu0 0
        %941 = vmatprep.subr.bf16.mxu0 0
        %942 = vmatpush1.bf16.msra.mxu0 0
        %943 = vmatprep.subr.bf16.mxu0 0
        %944 = vmatpush1.bf16.msra.mxu0 0
        %945 = vmatprep.subr.bf16.mxu0 0
        %946 = vmatpush1.bf16.msra.mxu0 0
        %947 = vmatprep.subr.bf16.mxu0 %v419
        %948 = vmatpush1.bf16.msra.mxu0 %v416
        %949 = vmatprep.subr.bf16.mxu0 %v396
        %950 = vmatpush1.bf16.msra.mxu0 %v395
        %951 = vmatprep.subr.bf16.mxu0 %v392
        %952 = vmatpush1.bf16.msra.mxu0 %v391
        %953 = vmatprep.subr.bf16.mxu0 0
        %954 = vmatpush2.bf16.msra.mxu0 0
        %955 = vmatprep.subr.bf16.mxu0 0
        %956 = vmatpush2.bf16.msra.mxu0 0
        %957 = vmatprep.subr.bf16.mxu0 0
        %958 = vmatpush2.bf16.msra.mxu0 0
        %959 = vmatprep.subr.bf16.mxu0 0
        %960 = vmatpush2.bf16.msra.mxu0 0
        %961 = vmatprep.subr.bf16.mxu0 0
        %962 = vmatpush2.bf16.msra.mxu0 0
        %963 = vmatprep.subr.bf16.mxu0 0
        %964 = vmatpush2.bf16.msra.mxu0 0
        %965 = vmatprep.subr.bf16.mxu0 0
        %966 = vmatpush2.bf16.msra.mxu0 0
        %967 = vmatprep.subr.bf16.mxu0 0
        %968 = vmatpush2.bf16.msra.mxu0 0
        %969 = vmatprep.mubr.bf16.mxu0 0
        %970 = vmatmul.mubr.bf16.gmra.mxu0 %v935
        %v971 = vpop.f32.mrf.mxu0
        %v972 = vadd.f32 0.0, %v971
        %v973 = vpop.f32.mrf.mxu0
        %v974 = vadd.f32 0.0, %v973
        %v975 = vpop.f32.mrf.mxu0
        %v976 = vpop.f32.mrf.mxu0
        %977 = vdwg.mxu0
        %978 = vmatprep.subr.bf16.mxu0 0
        %979 = vmatpush1.bf16.msra.mxu0 0
        %980 = vmatprep.subr.bf16.mxu0 0
        %981 = vmatpush1.bf16.msra.mxu0 0
        %982 = vmatprep.subr.bf16.mxu0 0
        %983 = vmatpush1.bf16.msra.mxu0 0
        %984 = vmatprep.subr.bf16.mxu0 0
        %985 = vmatpush1.bf16.msra.mxu0 0
        %986 = vmatprep.subr.bf16.mxu0 0
        %987 = vmatpush1.bf16.msra.mxu0 0
        %988 = vmatprep.subr.bf16.mxu0 %v425
        %989 = vmatpush1.bf16.msra.mxu0 %v422
        %990 = vmatprep.subr.bf16.mxu0 %v398
        %991 = vmatpush1.bf16.msra.mxu0 %v397
        %992 = vmatprep.subr.bf16.mxu0 %v394
        %993 = vmatpush1.bf16.msra.mxu0 %v393
        %994 = vmatprep.subr.bf16.mxu0 0
        %995 = vmatpush2.bf16.msra.mxu0 0
        %996 = vmatprep.subr.bf16.mxu0 0
        %997 = vmatpush2.bf16.msra.mxu0 0
        %998 = vmatprep.subr.bf16.mxu0 0
        %999 = vmatpush2.bf16.msra.mxu0 0
        %1000 = vmatprep.subr.bf16.mxu0 0
        %1001 = vmatpush2.bf16.msra.mxu0 0
        %1002 = vmatprep.subr.bf16.mxu0 0
        %1003 = vmatpush2.bf16.msra.mxu0 0
        %1004 = vmatprep.subr.bf16.mxu0 0
        %1005 = vmatpush2.bf16.msra.mxu0 0
        %1006 = vmatprep.subr.bf16.mxu0 0
        %1007 = vmatpush2.bf16.msra.mxu0 0
        %1008 = vmatprep.subr.bf16.mxu0 0
        %1009 = vmatpush2.bf16.msra.mxu0 0
        %1010 = vmatprep.mubr.bf16.mxu0 0
        %1011 = vmatmul.mubr.bf16.gmra.mxu0 %v935
        %v1012 = vpop.f32.mrf.mxu0
        %v1013 = vadd.f32 0.0, %v1012
        %v1014 = vpop.f32.mrf.mxu0
        %v1015 = vadd.f32 0.0, %v1014
        %v1016 = vpop.f32.mrf.mxu0
        %v1017 = vpop.f32.mrf.mxu0
        %1018 = vdwg.mxu0
        %v1023 = vrot.slane %v972, 4
        %v1024 = vrot.slane %v974, 4
        %v1025 = vrot.slane %v1013, 4
        %v1026 = vrot.slane %v1015, 4
        %v1031 = vadd.f32 %v301, %v1023
        %v1032 = vadd.f32 %v303, %v1024
        %v1033 = vadd.f32 %v342, %v1025
        %v1034 = vadd.f32 %v344, %v1026
        %v1035 = vxor.u32 %v1031, 2147483648
        %v1036 = vxor.u32 %v1032, 2147483648
        %v1037 = vxor.u32 %v1033, 2147483648
        %v1038 = vmul.f32 %v1035, 1.442695
        %v1039 = vpow.pop %v1038
        %v1040 = vmul.f32 %v1036, 1.442695
        %v1041 = vpow.pop %v1040
        %v1042 = vmul.f32 %v1037, 1.442695
        %v1043 = vpow.pop %v1042
        %v1044 = vadd.f32 %v1039, 1.0
        %v1045 = vadd.f32 %v1041, 1.0
        %v1046 = vadd.f32 %v1043, 1.0
        %v1047 = vrcp.pop %v1044
        %v1048 = vmul.f32 1.0, %v1047
        %v1049 = vrcp.pop %v1045
        %v1050 = vmul.f32 1.0, %v1049
        %v1051 = vrcp.pop %v1046
        %v1052 = vmul.f32 1.0, %v1051
        %v1053 = vtanh.pop %v1034
        %v1055 = vrot.slane %v926, 7
        %v1057 = vmul.f32 %v1050, %v1055
        %v1058 = vmul.f32 %v1048, %v1053
        %v1059 = vadd.f32 %v1057, %v1058
        %v1060 = vtanh.pop %v1059
        %v1061 = vmul.f32 %v1052, %v1060
        %v1062 = vpack.c.bf16 %v1061, %v1061
        %v1064 = vrot.slane %v1062, 2
        %v1066 = vsel %vm411, %v1064, 0
        %1068 = vmatprep.subr.bf16.mxu0 0
        %1069 = vmatpush1.bf16.msra.mxu0 0
        %1070 = vmatprep.subr.bf16.mxu0 0
        %1071 = vmatpush1.bf16.msra.mxu0 0
        %1072 = vmatprep.subr.bf16.mxu0 0
        %1073 = vmatpush1.bf16.msra.mxu0 0
        %1074 = vmatprep.subr.bf16.mxu0 0
        %1075 = vmatpush1.bf16.msra.mxu0 0
        %1076 = vmatprep.subr.bf16.mxu0 0
        %1077 = vmatpush1.bf16.msra.mxu0 0
        %1078 = vmatprep.subr.bf16.mxu0 %v419
        %1079 = vmatpush1.bf16.msra.mxu0 %v416
        %1080 = vmatprep.subr.bf16.mxu0 %v396
        %1081 = vmatpush1.bf16.msra.mxu0 %v395
        %1082 = vmatprep.subr.bf16.mxu0 %v392
        %1083 = vmatpush1.bf16.msra.mxu0 %v391
        %1084 = vmatprep.subr.bf16.mxu0 0
        %1085 = vmatpush2.bf16.msra.mxu0 0
        %1086 = vmatprep.subr.bf16.mxu0 0
        %1087 = vmatpush2.bf16.msra.mxu0 0
        %1088 = vmatprep.subr.bf16.mxu0 0
        %1089 = vmatpush2.bf16.msra.mxu0 0
        %1090 = vmatprep.subr.bf16.mxu0 0
        %1091 = vmatpush2.bf16.msra.mxu0 0
        %1092 = vmatprep.subr.bf16.mxu0 0
        %1093 = vmatpush2.bf16.msra.mxu0 0
        %1094 = vmatprep.subr.bf16.mxu0 0
        %1095 = vmatpush2.bf16.msra.mxu0 0
        %1096 = vmatprep.subr.bf16.mxu0 0
        %1097 = vmatpush2.bf16.msra.mxu0 0
        %1098 = vmatprep.subr.bf16.mxu0 0
        %1099 = vmatpush2.bf16.msra.mxu0 0
        %1100 = vmatprep.mubr.bf16.mxu0 0
        %1101 = vmatmul.mubr.bf16.gmra.mxu0 %v1066
        %v1102 = vpop.f32.mrf.mxu0
        %v1103 = vadd.f32 0.0, %v1102
        %v1104 = vpop.f32.mrf.mxu0
        %v1105 = vadd.f32 0.0, %v1104
        %v1106 = vpop.f32.mrf.mxu0
        %v1107 = vpop.f32.mrf.mxu0
        %1108 = vdwg.mxu0
        %1109 = vmatprep.subr.bf16.mxu0 0
        %1110 = vmatpush1.bf16.msra.mxu0 0
        %1111 = vmatprep.subr.bf16.mxu0 0
        %1112 = vmatpush1.bf16.msra.mxu0 0
        %1113 = vmatprep.subr.bf16.mxu0 0
        %1114 = vmatpush1.bf16.msra.mxu0 0
        %1115 = vmatprep.subr.bf16.mxu0 0
        %1116 = vmatpush1.bf16.msra.mxu0 0
        %1117 = vmatprep.subr.bf16.mxu0 0
        %1118 = vmatpush1.bf16.msra.mxu0 0
        %1119 = vmatprep.subr.bf16.mxu0 %v425
        %1120 = vmatpush1.bf16.msra.mxu0 %v422
        %1121 = vmatprep.subr.bf16.mxu0 %v398
        %1122 = vmatpush1.bf16.msra.mxu0 %v397
        %1123 = vmatprep.subr.bf16.mxu0 %v394
        %1124 = vmatpush1.bf16.msra.mxu0 %v393
        %1125 = vmatprep.subr.bf16.mxu0 0
        %1126 = vmatpush2.bf16.msra.mxu0 0
        %1127 = vmatprep.subr.bf16.mxu0 0
        %1128 = vmatpush2.bf16.msra.mxu0 0
        %1129 = vmatprep.subr.bf16.mxu0 0
        %1130 = vmatpush2.bf16.msra.mxu0 0
        %1131 = vmatprep.subr.bf16.mxu0 0
        %1132 = vmatpush2.bf16.msra.mxu0 0
        %1133 = vmatprep.subr.bf16.mxu0 0
        %1134 = vmatpush2.bf16.msra.mxu0 0
        %1135 = vmatprep.subr.bf16.mxu0 0
        %1136 = vmatpush2.bf16.msra.mxu0 0
        %1137 = vmatprep.subr.bf16.mxu0 0
        %1138 = vmatpush2.bf16.msra.mxu0 0
        %1139 = vmatprep.subr.bf16.mxu0 0
        %1140 = vmatpush2.bf16.msra.mxu0 0
        %1141 = vmatprep.mubr.bf16.mxu0 0
        %1142 = vmatmul.mubr.bf16.gmra.mxu0 %v1066
        %v1143 = vpop.f32.mrf.mxu0
        %v1144 = vadd.f32 0.0, %v1143
        %v1145 = vpop.f32.mrf.mxu0
        %v1146 = vadd.f32 0.0, %v1145
        %v1147 = vpop.f32.mrf.mxu0
        %v1148 = vpop.f32.mrf.mxu0
        %1149 = vdwg.mxu0
        %v1154 = vrot.slane %v1103, 3
        %v1155 = vrot.slane %v1105, 3
        %v1156 = vrot.slane %v1144, 3
        %v1157 = vrot.slane %v1146, 3
        %v1162 = vadd.f32 %v301, %v1154
        %v1163 = vadd.f32 %v303, %v1155
        %v1164 = vadd.f32 %v342, %v1156
        %v1165 = vadd.f32 %v344, %v1157
        %v1166 = vxor.u32 %v1162, 2147483648
        %v1167 = vxor.u32 %v1163, 2147483648
        %v1168 = vxor.u32 %v1164, 2147483648
        %v1169 = vmul.f32 %v1166, 1.442695
        %v1170 = vpow.pop %v1169
        %v1171 = vmul.f32 %v1167, 1.442695
        %v1172 = vpow.pop %v1171
        %v1173 = vmul.f32 %v1168, 1.442695
        %v1174 = vpow.pop %v1173
        %v1175 = vadd.f32 %v1170, 1.0
        %v1176 = vadd.f32 %v1172, 1.0
        %v1177 = vadd.f32 %v1174, 1.0
        %v1178 = vrcp.pop %v1175
        %v1179 = vmul.f32 1.0, %v1178
        %v1180 = vrcp.pop %v1176
        %v1181 = vmul.f32 1.0, %v1180
        %v1182 = vrcp.pop %v1177
        %v1183 = vmul.f32 1.0, %v1182
        %v1184 = vtanh.pop %v1165
        %v1186 = vrot.slane %v1059, 7
        %v1188 = vmul.f32 %v1181, %v1186
        %v1189 = vmul.f32 %v1179, %v1184
        %v1190 = vadd.f32 %v1188, %v1189
        %v1191 = vtanh.pop %v1190
        %v1192 = vmul.f32 %v1183, %v1191
        %v1193 = vpack.c.bf16 %v1192, %v1192
        %v1195 = vshrl.u32 %v1193, 16
        %v1197 = vrot.slane %v1195, 2
        %v1199 = vsel %vm411, %v1197, 0
        %1201 = vmatprep.subr.bf16.mxu0 0
        %1202 = vmatpush1.bf16.msra.mxu0 0
        %1203 = vmatprep.subr.bf16.mxu0 0
        %1204 = vmatpush1.bf16.msra.mxu0 0
        %1205 = vmatprep.subr.bf16.mxu0 0
        %1206 = vmatpush1.bf16.msra.mxu0 0
        %1207 = vmatprep.subr.bf16.mxu0 0
        %1208 = vmatpush1.bf16.msra.mxu0 0
        %1209 = vmatprep.subr.bf16.mxu0 0
        %1210 = vmatpush1.bf16.msra.mxu0 0
        %1211 = vmatprep.subr.bf16.mxu0 %v419
        %1212 = vmatpush1.bf16.msra.mxu0 %v416
        %1213 = vmatprep.subr.bf16.mxu0 %v396
        %1214 = vmatpush1.bf16.msra.mxu0 %v395
        %1215 = vmatprep.subr.bf16.mxu0 %v392
        %1216 = vmatpush1.bf16.msra.mxu0 %v391
        %1217 = vmatprep.subr.bf16.mxu0 0
        %1218 = vmatpush2.bf16.msra.mxu0 0
        %1219 = vmatprep.subr.bf16.mxu0 0
        %1220 = vmatpush2.bf16.msra.mxu0 0
        %1221 = vmatprep.subr.bf16.mxu0 0
        %1222 = vmatpush2.bf16.msra.mxu0 0
        %1223 = vmatprep.subr.bf16.mxu0 0
        %1224 = vmatpush2.bf16.msra.mxu0 0
        %1225 = vmatprep.subr.bf16.mxu0 0
        %1226 = vmatpush2.bf16.msra.mxu0 0
        %1227 = vmatprep.subr.bf16.mxu0 0
        %1228 = vmatpush2.bf16.msra.mxu0 0
        %1229 = vmatprep.subr.bf16.mxu0 0
        %1230 = vmatpush2.bf16.msra.mxu0 0
        %1231 = vmatprep.subr.bf16.mxu0 0
        %1232 = vmatpush2.bf16.msra.mxu0 0
        %1233 = vmatprep.mubr.bf16.mxu0 0
        %1234 = vmatmul.mubr.bf16.gmra.mxu0 %v1199
        %v1235 = vpop.f32.mrf.mxu0
        %v1236 = vadd.f32 0.0, %v1235
        %v1237 = vpop.f32.mrf.mxu0
        %v1238 = vadd.f32 0.0, %v1237
        %v1239 = vpop.f32.mrf.mxu0
        %v1240 = vpop.f32.mrf.mxu0
        %1241 = vdwg.mxu0
        %1242 = vmatprep.subr.bf16.mxu0 0
        %1243 = vmatpush1.bf16.msra.mxu0 0
        %1244 = vmatprep.subr.bf16.mxu0 0
        %1245 = vmatpush1.bf16.msra.mxu0 0
        %1246 = vmatprep.subr.bf16.mxu0 0
        %1247 = vmatpush1.bf16.msra.mxu0 0
        %1248 = vmatprep.subr.bf16.mxu0 0
        %1249 = vmatpush1.bf16.msra.mxu0 0
        %1250 = vmatprep.subr.bf16.mxu0 0
        %1251 = vmatpush1.bf16.msra.mxu0 0
        %1252 = vmatprep.subr.bf16.mxu0 %v425
        %1253 = vmatpush1.bf16.msra.mxu0 %v422
        %1254 = vmatprep.subr.bf16.mxu0 %v398
        %1255 = vmatpush1.bf16.msra.mxu0 %v397
        %1256 = vmatprep.subr.bf16.mxu0 %v394
        %1257 = vmatpush1.bf16.msra.mxu0 %v393
        %1258 = vmatprep.subr.bf16.mxu0 0
        %1259 = vmatpush2.bf16.msra.mxu0 0
        %1260 = vmatprep.subr.bf16.mxu0 0
        %1261 = vmatpush2.bf16.msra.mxu0 0
        %1262 = vmatprep.subr.bf16.mxu0 0
        %1263 = vmatpush2.bf16.msra.mxu0 0
        %1264 = vmatprep.subr.bf16.mxu0 0
        %1265 = vmatpush2.bf16.msra.mxu0 0
        %1266 = vmatprep.subr.bf16.mxu0 0
        %1267 = vmatpush2.bf16.msra.mxu0 0
        %1268 = vmatprep.subr.bf16.mxu0 0
        %1269 = vmatpush2.bf16.msra.mxu0 0
        %1270 = vmatprep.subr.bf16.mxu0 0
        %1271 = vmatpush2.bf16.msra.mxu0 0
        %1272 = vmatprep.subr.bf16.mxu0 0
        %1273 = vmatpush2.bf16.msra.mxu0 0
        %1274 = vmatprep.mubr.bf16.mxu0 0
        %1275 = vmatmul.mubr.bf16.gmra.mxu0 %v1199
        %v1276 = vpop.f32.mrf.mxu0
        %v1277 = vadd.f32 0.0, %v1276
        %v1278 = vpop.f32.mrf.mxu0
        %v1279 = vadd.f32 0.0, %v1278
        %v1280 = vpop.f32.mrf.mxu0
        %v1281 = vpop.f32.mrf.mxu0
        %1282 = vdwg.mxu0
        %v1287 = vrot.slane %v1236, 2
        %v1288 = vrot.slane %v1238, 2
        %v1289 = vrot.slane %v1277, 2
        %v1290 = vrot.slane %v1279, 2
        %v1295 = vadd.f32 %v301, %v1287
        %v1296 = vadd.f32 %v303, %v1288
        %v1297 = vadd.f32 %v342, %v1289
        %v1298 = vadd.f32 %v344, %v1290
        %v1299 = vxor.u32 %v1295, 2147483648
        %v1300 = vxor.u32 %v1296, 2147483648
        %v1301 = vxor.u32 %v1297, 2147483648
        %v1302 = vmul.f32 %v1299, 1.442695
        %v1303 = vpow.pop %v1302
        %v1304 = vmul.f32 %v1300, 1.442695
        %v1305 = vpow.pop %v1304
        %v1306 = vmul.f32 %v1301, 1.442695
        %v1307 = vpow.pop %v1306
        %v1308 = vadd.f32 %v1303, 1.0
        %v1309 = vadd.f32 %v1305, 1.0
        %v1310 = vadd.f32 %v1307, 1.0
        %v1311 = vrcp.pop %v1308
        %v1312 = vmul.f32 1.0, %v1311
        %v1313 = vrcp.pop %v1309
        %v1314 = vmul.f32 1.0, %v1313
        %v1315 = vrcp.pop %v1310
        %v1316 = vmul.f32 1.0, %v1315
        %v1317 = vtanh.pop %v1298
        %v1319 = vrot.slane %v1190, 7
        %v1321 = vmul.f32 %v1314, %v1319
        %v1322 = vmul.f32 %v1312, %v1317
        %v1323 = vadd.f32 %v1321, %v1322
        %v1324 = vtanh.pop %v1323
        %v1325 = vmul.f32 %v1316, %v1324
        %v1326 = vpack.c.bf16 %v1325, %v1325
        %v1328 = vrot.slane %v1326, 3
        %v1330 = vsel %vm411, %v1328, 0
        %1332 = vmatprep.subr.bf16.mxu0 0
        %1333 = vmatpush1.bf16.msra.mxu0 0
        %1334 = vmatprep.subr.bf16.mxu0 0
        %1335 = vmatpush1.bf16.msra.mxu0 0
        %1336 = vmatprep.subr.bf16.mxu0 0
        %1337 = vmatpush1.bf16.msra.mxu0 0
        %1338 = vmatprep.subr.bf16.mxu0 0
        %1339 = vmatpush1.bf16.msra.mxu0 0
        %1340 = vmatprep.subr.bf16.mxu0 0
        %1341 = vmatpush1.bf16.msra.mxu0 0
        %1342 = vmatprep.subr.bf16.mxu0 %v419
        %1343 = vmatpush1.bf16.msra.mxu0 %v416
        %1344 = vmatprep.subr.bf16.mxu0 %v396
        %1345 = vmatpush1.bf16.msra.mxu0 %v395
        %1346 = vmatprep.subr.bf16.mxu0 %v392
        %1347 = vmatpush1.bf16.msra.mxu0 %v391
        %1348 = vmatprep.subr.bf16.mxu0 0
        %1349 = vmatpush2.bf16.msra.mxu0 0
        %1350 = vmatprep.subr.bf16.mxu0 0
        %1351 = vmatpush2.bf16.msra.mxu0 0
        %1352 = vmatprep.subr.bf16.mxu0 0
        %1353 = vmatpush2.bf16.msra.mxu0 0
        %1354 = vmatprep.subr.bf16.mxu0 0
        %1355 = vmatpush2.bf16.msra.mxu0 0
        %1356 = vmatprep.subr.bf16.mxu0 0
        %1357 = vmatpush2.bf16.msra.mxu0 0
        %1358 = vmatprep.subr.bf16.mxu0 0
        %1359 = vmatpush2.bf16.msra.mxu0 0
        %1360 = vmatprep.subr.bf16.mxu0 0
        %1361 = vmatpush2.bf16.msra.mxu0 0
        %1362 = vmatprep.subr.bf16.mxu0 0
        %1363 = vmatpush2.bf16.msra.mxu0 0
        %1364 = vmatprep.mubr.bf16.mxu0 0
        %1365 = vmatmul.mubr.bf16.gmra.mxu0 %v1330
        %v1366 = vpop.f32.mrf.mxu0
        %v1367 = vadd.f32 0.0, %v1366
        %v1368 = vpop.f32.mrf.mxu0
        %v1369 = vadd.f32 0.0, %v1368
        %v1370 = vpop.f32.mrf.mxu0
        %v1371 = vpop.f32.mrf.mxu0
        %1372 = vdwg.mxu0
        %1373 = vmatprep.subr.bf16.mxu0 0
        %1374 = vmatpush1.bf16.msra.mxu0 0
        %1375 = vmatprep.subr.bf16.mxu0 0
        %1376 = vmatpush1.bf16.msra.mxu0 0
        %1377 = vmatprep.subr.bf16.mxu0 0
        %1378 = vmatpush1.bf16.msra.mxu0 0
        %1379 = vmatprep.subr.bf16.mxu0 0
        %1380 = vmatpush1.bf16.msra.mxu0 0
        %1381 = vmatprep.subr.bf16.mxu0 0
        %1382 = vmatpush1.bf16.msra.mxu0 0
        %1383 = vmatprep.subr.bf16.mxu0 %v425
        %1384 = vmatpush1.bf16.msra.mxu0 %v422
        %1385 = vmatprep.subr.bf16.mxu0 %v398
        %1386 = vmatpush1.bf16.msra.mxu0 %v397
        %1387 = vmatprep.subr.bf16.mxu0 %v394
        %1388 = vmatpush1.bf16.msra.mxu0 %v393
        %1389 = vmatprep.subr.bf16.mxu0 0
        %1390 = vmatpush2.bf16.msra.mxu0 0
        %1391 = vmatprep.subr.bf16.mxu0 0
        %1392 = vmatpush2.bf16.msra.mxu0 0
        %1393 = vmatprep.subr.bf16.mxu0 0
        %1394 = vmatpush2.bf16.msra.mxu0 0
        %1395 = vmatprep.subr.bf16.mxu0 0
        %1396 = vmatpush2.bf16.msra.mxu0 0
        %1397 = vmatprep.subr.bf16.mxu0 0
        %1398 = vmatpush2.bf16.msra.mxu0 0
        %1399 = vmatprep.subr.bf16.mxu0 0
        %1400 = vmatpush2.bf16.msra.mxu0 0
        %1401 = vmatprep.subr.bf16.mxu0 0
        %1402 = vmatpush2.bf16.msra.mxu0 0
        %1403 = vmatprep.subr.bf16.mxu0 0
        %1404 = vmatpush2.bf16.msra.mxu0 0
        %1405 = vmatprep.mubr.bf16.mxu0 0
        %1406 = vmatmul.mubr.bf16.gmra.mxu0 %v1330
        %v1407 = vpop.f32.mrf.mxu0
        %v1408 = vadd.f32 0.0, %v1407
        %v1409 = vpop.f32.mrf.mxu0
        %v1410 = vadd.f32 0.0, %v1409
        %v1411 = vpop.f32.mrf.mxu0
        %v1412 = vpop.f32.mrf.mxu0
        %1413 = vdwg.mxu0
        %v1418 = vrot.slane %v1367, 1
        %v1419 = vrot.slane %v1369, 1
        %v1420 = vrot.slane %v1408, 1
        %v1421 = vrot.slane %v1410, 1
        %v1426 = vadd.f32 %v301, %v1418
        %v1427 = vadd.f32 %v303, %v1419
        %v1428 = vadd.f32 %v342, %v1420
        %v1429 = vadd.f32 %v344, %v1421
        %v1430 = vxor.u32 %v1426, 2147483648
        %v1431 = vxor.u32 %v1427, 2147483648
        %v1432 = vxor.u32 %v1428, 2147483648
        %v1433 = vmul.f32 %v1430, 1.442695
        %v1434 = vpow.pop %v1433
        %v1435 = vmul.f32 %v1431, 1.442695
        %v1436 = vpow.pop %v1435
        %v1437 = vmul.f32 %v1432, 1.442695
        %v1438 = vpow.pop %v1437
        %v1439 = vadd.f32 %v1434, 1.0
        %v1440 = vadd.f32 %v1436, 1.0
        %v1441 = vadd.f32 %v1438, 1.0
        %v1442 = vrcp.pop %v1439
        %v1443 = vmul.f32 1.0, %v1442
        %v1444 = vrcp.pop %v1440
        %v1445 = vmul.f32 1.0, %v1444
        %v1446 = vrcp.pop %v1441
        %v1447 = vmul.f32 1.0, %v1446
        %v1448 = vtanh.pop %v1429
        %v1450 = vrot.slane %v1323, 7
        %v1452 = vmul.f32 %v1445, %v1450
        %v1453 = vmul.f32 %v1443, %v1448
        %v1454 = vadd.f32 %v1452, %v1453
        %v1455 = vtanh.pop %v1454
        %v1456 = vmul.f32 %v1447, %v1455
        %v1457 = vpack.c.bf16 %v1456, %v1456
        %v1458 = vld [vmem:[#allocation5 + $0x60] sm:$0xf]
        %v1459 = vld [vmem:[#allocation5 + $0x70] sm:$0xf]
        %v1460 = vld [vmem:[#allocation5 + $0x80] sm:$0xf]
        %v1461 = vld [vmem:[#allocation5 + $0x90] sm:$0xf]
        %v1462 = vld [vmem:[#allocation5 + $0xa0] sm:$0xf]
        %v1463 = vld [vmem:[#allocation7 + $0x3] sm:$0x1]
        %v1465 = vshrl.u32 %v1457, 16
        %v1467 = vrot.slane %v1465, 3
        %v1473 = vunpack.c.l.b16 %v1458
        %v1474 = vunpack.c.l.b16 %v1459
        %v1475 = vunpack.c.l.b16 %v1460
        %v1476 = vunpack.c.l.b16 %v1461
        %v1477 = vunpack.c.l.b16 %v1462
        %v1478 = vpack.c.b16 %v1474, %v1473
        %v1479 = vpack.c.b16 %v1476, %v1475
        %v1480 = vpack.c.b16 %v1477, %v1477
        %v1484 = vsel %vm411, %v1467, 0
        %v1487 = vsel %vm253, %v1480, 0
        %1489 = vmatprep.subr.bf16.mxu0 0
        %1490 = vmatpush1.bf16.msra.mxu0 0
        %1491 = vmatprep.subr.bf16.mxu0 0
        %1492 = vmatpush1.bf16.msra.mxu0 0
        %1493 = vmatprep.subr.bf16.mxu0 0
        %1494 = vmatpush1.bf16.msra.mxu0 0
        %1495 = vmatprep.subr.bf16.mxu0 0
        %1496 = vmatpush1.bf16.msra.mxu0 0
        %1497 = vmatprep.subr.bf16.mxu0 0
        %1498 = vmatpush1.bf16.msra.mxu0 0
        %1499 = vmatprep.subr.bf16.mxu0 0
        %1500 = vmatpush1.bf16.msra.mxu0 %v1487
        %1501 = vmatprep.subr.bf16.mxu0 0
        %1502 = vmatpush1.bf16.msra.mxu0 %v1479
        %1503 = vmatprep.subr.bf16.mxu0 0
        %1504 = vmatpush1.bf16.msra.mxu0 %v1478
        %1505 = vmatprep.subr.bf16.mxu0 0
        %1506 = vmatpush2.bf16.msra.mxu0 0
        %1507 = vmatprep.subr.bf16.mxu0 0
        %1508 = vmatpush2.bf16.msra.mxu0 0
        %1509 = vmatprep.subr.bf16.mxu0 0
        %1510 = vmatpush2.bf16.msra.mxu0 0
        %1511 = vmatprep.subr.bf16.mxu0 0
        %1512 = vmatpush2.bf16.msra.mxu0 0
        %1513 = vmatprep.subr.bf16.mxu0 0
        %1514 = vmatpush2.bf16.msra.mxu0 0
        %1515 = vmatprep.subr.bf16.mxu0 0
        %1516 = vmatpush2.bf16.msra.mxu0 0
        %1517 = vmatprep.subr.bf16.mxu0 0
        %1518 = vmatpush2.bf16.msra.mxu0 0
        %1519 = vmatprep.subr.bf16.mxu0 0
        %1520 = vmatpush2.bf16.msra.mxu0 0
        %1521 = vmatprep.mubr.bf16.mxu0 0
        %1522 = vmatmul.mubr.bf16.gmra.mxu0 %v1484
        %v1523 = vpop.f32.mrf.mxu0
        %v1524 = vadd.f32 %v1463, %v1523
        %v1525 = vpop.f32.mrf.mxu0
        %v1526 = vpop.f32.mrf.mxu0
        %v1527 = vpop.f32.mrf.mxu0
        %1528 = vdwg.mxu0
        %1529 = vst [vmem:[%s211] sm:$0x1] %v1524
        %s1530 = sand.u32 %s97, 1
        %s1531 = scalar_lea.sflag [#allocation4], %s1530
        %s1532 = sand.u32 %s97, 1
        %s1533 = scalar_lea.vmem [#allocation8], %s1532
        // Predicated region
        $region45: #{tpu_custom_call.1} parent=31 // pred_check
          %p1534 = pneg %p107
        $region46: #{tpu_custom_call.1} parent=31 // pred_check_branch
          %1536 = sbr.rel (%p1534) target = $region48
        $region47: #{tpu_custom_call.1} parent=31 // pred_region
          %s1538 = ssub.s32 16, 16
          %1539 = vsyncadd %s1531, %s1538
          %s1540 = smul.addr %s21, 16
          %s1541 = scalar_lea.hbm %s3, %s1540
          %s1543 = sshll.u32 %s1533, 4
          %s1544 = int_to_ptr.vmem [resolvable:$true] %s1543
          %1546 = dma.vmem_to_hbm [thread:$0]  %s1544, 16, %s1541, %s1531
        $region48: #{tpu_custom_call.1} parent=31 // pred_fallthru
          _
      $region32: #{tpu_custom_call.1} parent=5 // pred_fallthru
        _
      %p1547 = scmp.le.s32.totalorder 2, %s16
      // Predicated region
      $region49: #{tpu_custom_call.1} parent=5 // pred_check
        %p1548 = pneg %p1547
      $region50: #{tpu_custom_call.1} parent=5 // pred_check_branch
        %1550 = sbr.rel (%p1548) target = $region52
      $region51: #{tpu_custom_call.1} parent=5 // pred_region
        %s1551 = ssub.s32 %s16, 2
        // Predicated region
        $region53: #{tpu_custom_call.1} parent=51 // pred_check
          %p1552 = pneg %p113
        $region54: #{tpu_custom_call.1} parent=51 // pred_check_branch
          %1554 = sbr.rel (%p1552) target = $region56
        $region55: #{tpu_custom_call.1} parent=51 // pred_region
          %s1555 = sand.u32 %s98, 1
          %s1556 = scalar_lea.sflag [#allocation4], %s1555
          %s1557 = sand.u32 %s98, 1
          %s1558 = scalar_lea.vmem [#allocation8], %s1557
          %1559 = dma.done %s1556, 16
        $region56: #{tpu_custom_call.1} parent=51 // pred_fallthru
          _
      $region52: #{tpu_custom_call.1} parent=5 // pred_fallthru
        _
    $region6: #{tpu_custom_call.1} parent=1 // loop_footer
      %s20 = sadd.s32 1, %s16
    $region7: #{tpu_custom_call.1} parent=1 // loop_footer_branch
      %15 = sbr.rel target = $region3
    $region8: #{tpu_custom_call.1} parent=1 // loop_exit
      _
    %1560 = vsyncpa [#allocation3], 1
    %s1561 = scalar_lea.sflag [#allocation3], 1
    %1562 = vsyncpa %s1561, 1
    %1563 = vsyncpa [#allocation6], 1
    %1564 = vsyncpa [#allocation4], 1
    %s1565 = scalar_lea.sflag [#allocation4], 1
    %1566 = vsyncpa %s1565, 1

</llo_original>
